<compile_context>
chip_gen: v7x
topology: tpu7x:2x2x1
jax: 0.10.0
libtpu: 0.0.40
codegen_flags: <defaults>
</compile_context>

<pallas_src>
import numpy as np

import jax
import jax.numpy as jnp
from jax import lax
from jax.experimental import pallas as pl
from jax.experimental.pallas import tpu as pltpu


# ----------------------------------------------------------------------------
# The single fused kernel
# ----------------------------------------------------------------------------
def _embedding_fused_kernel(feat_ref, cloud_ref, pcf_ref,
                            w_pc_enc_ref, w_pfc1_ref, w_fc1_ref,
                            w_dd_ref, b_ref, w_conv_hbm,
                            o_ref,
                            w_conv_vmem, dma_sem):
    # Static sizes derived from ref shapes.
    E = w_pc_enc_ref.shape[1]      # H*W*points_ch  (cloud encoding size)
    Fsz = feat_ref.shape[1]        # H*W*c_feat     (flattened feature map)
    C = w_pfc1_ref.shape[0]        # H*W*out_ch     (flattened conv output)
    D = w_pfc1_ref.shape[1]        # n_points*out_ch
    ob = E + C                     # start of the D-sized biases in the pack

    # Kick off the dominant DMA (bf16 Toeplitz conv slab, HBM -> VMEM) NOW so
    # it overlaps the independent pc_enc / fc_1 / AdaIN work below.
    conv_cp = pltpu.make_async_copy(w_conv_hbm, w_conv_vmem, dma_sem)
    conv_cp.start()

    def mm(a, w):
        # Native bf16 MXU path with f32 accumulation.  Weights are stored
        # bf16; only the (1, N) activation row is cast (a handful of vregs).
        return jnp.dot(a.astype(jnp.bfloat16), w,
                       preferred_element_type=jnp.float32)

    def bias(off, size):           # static, lane-aligned slice of the bias pack
        return b_ref[:, off:off + size]

    feat = feat_ref[...]                                             # (1, Fsz) f32

    # ---- work that does NOT need the conv slab ------------------------------
    # pc_enc: cloud -> (1, E)
    cloud_enc = mm(cloud_ref[...], w_pc_enc_ref[...]) + bias(0, E)

    # fc_1 -> sigmoid -> fc_2
    pf = jax.nn.sigmoid(mm(pcf_ref[...], w_fc1_ref[...]) + bias(ob + 2 * D, D))
    pf = mm(pf, w_dd_ref[:, D:2 * D]) + bias(ob + 3 * D, D)          # (1, D)

    # AdaIN (torch.mean / torch.std over the whole tensor; std unbiased).
    mean_x = jnp.mean(feat, keepdims=True)                           # (1, 1)
    dev_x = jnp.sqrt(jnp.sum((feat - mean_x) ** 2, keepdims=True) / (Fsz - 1))
    mean_y = jnp.mean(pf, keepdims=True)
    inv_dev_y = lax.rsqrt(jnp.sum((pf - mean_y) ** 2, keepdims=True) / (D - 1))
    pc_feat = dev_x * (pf - mean_y) * inv_dev_y + mean_x             # (1, D)

    # ---- conv branch: needs the slab, so wait here --------------------------
    conv_cp.wait()
    # Channel-concat + 3x3 SAME conv + sigmoid as ONE dense matmul.  Slab rows
    # are ordered [cloud channels ; feature channels], matching the lane-axis
    # concat of the two 128-aligned (1, N) rows.
    x_cat = jnp.concatenate([cloud_enc, feat], axis=1)               # (1, E+Fsz)
    conv = jax.nn.sigmoid(mm(x_cat, w_conv_vmem[...]) + bias(E, C))  # (1, C)

    # proj_fc_1 -> sigmoid -> proj_fc_2
    h = jax.nn.sigmoid(mm(conv, w_pfc1_ref[...]) + bias(ob, D))
    pc_out = mm(h, w_dd_ref[:, 0:D]) + bias(ob + D, D)               # (1, D)

    # fc_3 on concat([pc_out, pc_feat]) == pc_out @ W3a + pc_feat @ W3b
    h3 = jax.nn.sigmoid(mm(pc_out, w_dd_ref[:, 2 * D:3 * D])
                        + mm(pc_feat, w_dd_ref[:, 3 * D:4 * D])
                        + bias(ob + 4 * D, D))

    # fc_4  (lane-dense (1, D) output)
    o_ref[...] = mm(h3, w_dd_ref[:, 4 * D:5 * D]) + bias(ob + 5 * D, D)


# ----------------------------------------------------------------------------
# Forward wrapper: one pallas_call, only free input reshapes outside it.
# ----------------------------------------------------------------------------
@jax.jit
def embedding_forward(params, features, cloud, cloud_features):
    D = params["w_pfc1"].shape[1]
    RC, C = params["w_conv_big"].shape          # (E+Fsz, C) bf16 slab
    vmem = pl.BlockSpec(memory_space=pltpu.MemorySpace.VMEM)
    out = pl.pallas_call(
        _embedding_fused_kernel,
        out_shape=jax.ShapeDtypeStruct((1, D), jnp.float32),
        in_specs=[vmem] * 8 + [pl.BlockSpec(memory_space=pl.ANY)],
        out_specs=vmem,
        scratch_shapes=[pltpu.VMEM((RC, C), jnp.bfloat16),   # conv-slab buffer
                        pltpu.SemaphoreType.DMA(())],
    )(features.reshape(1, -1),            # (1, H*W*c_feat)   free reshape
      cloud.reshape(1, -1),               # (1, 3*n_points)   free reshape
      cloud_features.reshape(1, -1),      # (1, p0*p1)        free reshape
      params["w_pc_enc"], params["w_pfc1"], params["w_fc1"],
      params["w_dd"], params["biases"], params["w_conv_big"])
    return out.reshape(-1)                                   # (n_points*out_ch,)


# ----------------------------------------------------------------------------
# Parameter init (deterministic, PyTorch-style uniform(-1/sqrt(fan_in), ...))
# Returns (packed bf16 kernel params, raw f32 params for the JAX reference).
# ----------------------------------------------------------------------------
def _uniform(key, shape, bound):
    return jax.random.uniform(key, shape, jnp.float32, -bound, bound)


def init_params(key, H, W, c_feat, n_points, points_ch, pcf_shape, out_ch):
    D = n_points * out_ch
    c_in = c_feat + points_ch
    E = H * W * points_ch
    Fsz = H * W * c_feat
    C = H * W * out_ch
    P = pcf_shape[0] * pcf_shape[1]

    # The static, zero-cost ref slices in the kernel (bias pack, w_dd columns,
    # conv-slab row split at E) are only free when offsets are 128-lane aligned.
    for name, v in (("E", E), ("Fsz", Fsz), ("C", C), ("D", D)):
        assert v % 128 == 0, (
            f"{name}={v} must be a multiple of 128; otherwise re-pad the packs "
            f"at init time to avoid Mosaic relayout copies.")

    ks = jax.random.split(key, 16)

    def linear(kw, kb, fan_in, fan_out):
        bnd = float(fan_in) ** -0.5
        return _uniform(kw, (fan_in, fan_out), bnd), _uniform(kb, (1, fan_out), bnd)

    w_pc_enc, b_pc_enc = linear(ks[0], ks[1], 3 * n_points, E)

    bnd = float(c_in * 9) ** -0.5
    w_conv3 = _uniform(ks[2], (3, 3, c_in, out_ch), bnd)     # (ky, kx, Cin, Cout)
    b_conv = _uniform(ks[3], (1, out_ch), bnd)

    w_pfc1, b_pfc1 = linear(ks[4], ks[5], C, D)
    w_pfc2, b_pfc2 = linear(ks[6], ks[7], D, D)
    w_fc1, b_fc1 = linear(ks[8], ks[9], P, D)
    w_fc2, b_fc2 = linear(ks[10], ks[11], D, D)
    w_fc3, b_fc3 = linear(ks[12], ks[13], 2 * D, D)
    w_fc4, b_fc4 = linear(ks[14], ks[15], D, D)

    # ---- Fold the 3x3 SAME conv into a dense Toeplitz matmul (init-time only).
    wc = np.asarray(w_conv3)
    big = np.zeros((H * W * c_in, C), np.float32)
    for dy in range(3):
        for dx in range(3):
            for ho in range(H):
                h = ho + dy - 1
                if not 0 <= h < H:
                    continue
                for wo in range(W):
                    w = wo + dx - 1
                    if not 0 <= w < W:
                        continue
                    r0 = (h * W + w) * c_in
                    c0 = (ho * W + wo) * out_ch
                    big[r0:r0 + c_in, c0:c0 + out_ch] = wc[dy, dx]
    big3 = big.reshape(H * W, c_in, C)
    # Rows ordered: cloud channels first (HWC flatten of cloud_enc), then
    # feature channels (HWC flatten of features) -> fused single conv matmul.
    w_conv_big = np.concatenate(
        [big3[:, :points_ch, :].reshape(E, C),
         big3[:, points_ch:, :].reshape(Fsz, C)], axis=0)            # (E+Fsz, C)
    b_conv_big = np.tile(np.asarray(b_conv), (1, H * W))             # (1, C)

    # ---- Pack the five DxD weights and all eight biases (fewer DMAs).
    w_dd = jnp.concatenate([w_pfc2, w_fc2, w_fc3[:D], w_fc3[D:], w_fc4], axis=1)
    biases = jnp.concatenate(
        [b_pc_enc, jnp.asarray(b_conv_big), b_pfc1, b_pfc2,
         b_fc1, b_fc2, b_fc3, b_fc4], axis=1)                        # f32 (tiny)

    # Kernel weight slabs in bf16 (f32 accumulation happens on the MXU).
    bf16 = jnp.bfloat16
    params = {
        "w_pc_enc": w_pc_enc.astype(bf16),
        "w_conv_big": jnp.asarray(w_conv_big).astype(bf16),
        "w_pfc1": w_pfc1.astype(bf16),
        "w_fc1": w_fc1.astype(bf16),
        "w_dd": w_dd.astype(bf16),
        "biases": biases,
    }
    raw = dict(w_pc_enc=w_pc_enc, b_pc_enc=b_pc_enc,
               w_conv3=w_conv3, b_conv=b_conv,
               w_pfc1=w_pfc1, b_pfc1=b_pfc1, w_pfc2=w_pfc2, b_pfc2=b_pfc2,
               w_fc1=w_fc1, b_fc1=b_fc1, w_fc2=w_fc2, b_fc2=b_fc2,
               w_fc3=w_fc3, b_fc3=b_fc3, w_fc4=w_fc4, b_fc4=b_fc4)
    return params, raw


# ----------------------------------------------------------------------------
# Pure-JAX f32 reference (real lax.conv) for a correctness sanity check.
# ----------------------------------------------------------------------------
def reference_forward(raw, features, cloud, cloud_features):
    hp = lax.Precision.HIGHEST

    def dot(a, b):
        return jnp.dot(a, b, precision=hp)

    H, W, _ = features.shape
    pc = dot(cloud.reshape(1, -1), raw["w_pc_enc"]) + raw["b_pc_enc"]
    points_ch = pc.shape[1] // (H * W)
    x = jnp.concatenate([pc.reshape(H, W, points_ch), features], axis=-1)
    conv = lax.conv_general_dilated(
        x[None], raw["w_conv3"], window_strides=(1, 1), padding="SAME",
        dimension_numbers=("NHWC", "HWIO", "NHWC"), precision=hp)[0]
    conv = jax.nn.sigmoid(conv + raw["b_conv"][0])
    h = jax.nn.sigmoid(dot(conv.reshape(1, -1), raw["w_pfc1"]) + raw["b_pfc1"])
    pc_out = dot(h, raw["w_pfc2"]) + raw["b_pfc2"]
    pf = jax.nn.sigmoid(dot(cloud_features.reshape(1, -1), raw["w_fc1"]) + raw["b_fc1"])
    pf = dot(pf, raw["w_fc2"]) + raw["b_fc2"]
    mean_x = jnp.mean(features)
    dev_x = jnp.std(features, ddof=1)
    mean_y = jnp.mean(pf)
    dev_y = jnp.std(pf, ddof=1)
    pc_feat = dev_x * (pf - mean_y) / dev_y + mean_x
    cat = jnp.concatenate([pc_out, pc_feat], axis=-1)
    h3 = jax.nn.sigmoid(dot(cat, raw["w_fc3"]) + raw["b_fc3"])
    return (dot(h3, raw["w_fc4"]) + raw["b_fc4"]).reshape(-1)


# ----------------------------------------------------------------------------
if __name__ == "__main__":
    # feature_map_sh=(8, 8, 4), n_points=16, points_ch=4, pcf_shape=(8, 16),
    # out_shape=(16, 8)  ->  D = n_points * out_shape[1] = 128
    H, W, C_FEAT = 8, 8, 4
    N_POINTS = 16
    POINTS_CH = 4
    PCF_SHAPE = (8, 16)
    OUT_CH = 8

    root = jax.random.PRNGKey(0)
    k_feat, k_cloud, k_pcf, k_params = jax.random.split(root, 4)

    features = jax.random.normal(k_feat, (H, W, C_FEAT), jnp.float32)
    cloud = jax.random.normal(k_cloud, (N_POINTS, 3), jnp.float32)
    cloud_features = jax.random.normal(k_pcf, PCF_SHAPE, jnp.float32)

    params, raw = init_params(
        k_params, H, W, C_FEAT, N_POINTS, POINTS_CH, PCF_SHAPE, OUT_CH)

    out = embedding_forward(params, features, cloud, cloud_features)
    out = jax.block_until_ready(out)

    assert out.shape == (N_POINTS * OUT_CH,), out.shape
    assert bool(jnp.all(jnp.isfinite(out)))

    # Structural check vs full-f32 JAX reference; bf16 weights + MXU precision
    # give ~1e-3-level deviations, comfortably inside 5e-2.
    ref = reference_forward(raw, features, cloud, cloud_features)
    assert bool(jnp.allclose(out, ref, rtol=5e-2, atol=5e-2)), (
        float(jnp.max(jnp.abs(out - ref))))

    print("KERNEL_OK")
</pallas_src>

<mosaic_0001>
module attributes {stable_mosaic.version = 11 : i64} {
  func.func @_embedding_fused_kernel(%arg0: memref<1x256xf32, #tpu.memory_space<vmem>>, %arg1: memref<1x48xf32, #tpu.memory_space<vmem>>, %arg2: memref<1x128xf32, #tpu.memory_space<vmem>>, %arg3: memref<48x256xbf16, #tpu.memory_space<vmem>>, %arg4: memref<512x128xbf16, #tpu.memory_space<vmem>>, %arg5: memref<128x128xbf16, #tpu.memory_space<vmem>>, %arg6: memref<128x640xbf16, #tpu.memory_space<vmem>>, %arg7: memref<1x1536xf32, #tpu.memory_space<vmem>>, %arg8: memref<512x512xbf16, #tpu.memory_space<any>>, %arg9: memref<1x128xf32, #tpu.memory_space<vmem>>, %arg10: memref<512x512xbf16, #tpu.memory_space<vmem>>, %arg11: memref<!tpu.dma_semaphore, #tpu.memory_space<semaphore_mem>>) attributes {dimension_semantics = [], scalar_prefetch = 0 : i64, scratch_operands = 2 : i64, tpu.core_type = #tpu.core_type<tc>} {
    tpu.enqueue_dma source(%arg8 : memref<512x512xbf16, #tpu.memory_space<any>>) target(%arg10 : memref<512x512xbf16, #tpu.memory_space<vmem>>) target_semaphore(%arg11 : memref<!tpu.dma_semaphore, #tpu.memory_space<semaphore_mem>>)
    %c0 = arith.constant 0 : index
    %c0_0 = arith.constant 0 : index
    %0 = vector.load %arg0[%c0, %c0_0] : memref<1x256xf32, #tpu.memory_space<vmem>>, vector<1x256xf32>
    %c0_1 = arith.constant 0 : index
    %c0_2 = arith.constant 0 : index
    %1 = vector.load %arg1[%c0_1, %c0_2] : memref<1x48xf32, #tpu.memory_space<vmem>>, vector<1x48xf32>
    %c0_3 = arith.constant 0 : index
    %c0_4 = arith.constant 0 : index
    %2 = vector.load %arg3[%c0_3, %c0_4] : memref<48x256xbf16, #tpu.memory_space<vmem>>, vector<48x256xbf16>
    %3 = arith.truncf %1 : vector<1x48xf32> to vector<1x48xbf16>
    %cst = arith.constant dense<0.000000e+00> : vector<1x256xf32>
    %4 = tpu.matmul %3, %2, %cst {dimension_numbers = #tpu.dot_dimension_numbers<[1], [0], [0], [1], [0, 0, 1, 1], [], []>} : vector<1x48xbf16>, vector<48x256xbf16>, vector<1x256xf32> -> vector<1x256xf32>
    %c0_5 = arith.constant 0 : index
    %c0_6 = arith.constant 0 : index
    %5 = vector.load %arg7[%c0_5, %c0_6] : memref<1x1536xf32, #tpu.memory_space<vmem>>, vector<1x256xf32>
    %6 = arith.addf %4, %5 : vector<1x256xf32>
    %c0_7 = arith.constant 0 : index
    %c0_8 = arith.constant 0 : index
    %7 = vector.load %arg2[%c0_7, %c0_8] : memref<1x128xf32, #tpu.memory_space<vmem>>, vector<1x128xf32>
    %c0_9 = arith.constant 0 : index
    %c0_10 = arith.constant 0 : index
    %8 = vector.load %arg5[%c0_9, %c0_10] : memref<128x128xbf16, #tpu.memory_space<vmem>>, vector<128x128xbf16>
    %9 = arith.truncf %7 : vector<1x128xf32> to vector<1x128xbf16>
    %cst_11 = arith.constant dense<0.000000e+00> : vector<1x128xf32>
    %10 = tpu.matmul %9, %8, %cst_11 {dimension_numbers = #tpu.dot_dimension_numbers<[1], [0], [0], [1], [0, 0, 1, 1], [], []>} : vector<1x128xbf16>, vector<128x128xbf16>, vector<1x128xf32> -> vector<1x128xf32>
    %c0_12 = arith.constant 0 : index
    %c1024 = arith.constant 1024 : index
    %11 = vector.load %arg7[%c0_12, %c1024] : memref<1x1536xf32, #tpu.memory_space<vmem>>, vector<1x128xf32>
    %12 = arith.addf %10, %11 : vector<1x128xf32>
    %13 = arith.negf %12 : vector<1x128xf32>
    %14 = math.exp %13 : vector<1x128xf32>
    %cst_13 = arith.constant 1.000000e+00 : f32
    %15 = vector.broadcast %cst_13 : f32 to vector<1x128xf32>
    %16 = arith.addf %15, %14 : vector<1x128xf32>
    %17 = arith.divf %15, %16 : vector<1x128xf32>
    %c0_14 = arith.constant 0 : index
    %c128 = arith.constant 128 : index
    %18 = vector.load %arg6[%c0_14, %c128] : memref<128x640xbf16, #tpu.memory_space<vmem>>, vector<128x128xbf16>
    %19 = arith.truncf %17 : vector<1x128xf32> to vector<1x128xbf16>
    %cst_15 = arith.constant dense<0.000000e+00> : vector<1x128xf32>
    %20 = tpu.matmul %19, %18, %cst_15 {dimension_numbers = #tpu.dot_dimension_numbers<[1], [0], [0], [1], [0, 0, 1, 1], [], []>} : vector<1x128xbf16>, vector<128x128xbf16>, vector<1x128xf32> -> vector<1x128xf32>
    %c0_16 = arith.constant 0 : index
    %c1152 = arith.constant 1152 : index
    %21 = vector.load %arg7[%c0_16, %c1152] : memref<1x1536xf32, #tpu.memory_space<vmem>>, vector<1x128xf32>
    %22 = arith.addf %20, %21 : vector<1x128xf32>
    %23 = vector.shape_cast %0 : vector<1x256xf32> to vector<1x1x256xf32>
    %cst_17 = arith.constant dense<0.000000e+00> : vector<1xf32>
    %24 = vector.multi_reduction <add>, %23, %cst_17 [1, 2] : vector<1x1x256xf32> to vector<1xf32>
    %25 = vector.shape_cast %24 : vector<1xf32> to vector<1x1x1xf32>
    %26 = vector.extract %25[0, 0, 0] : f32 from vector<1x1x1xf32>
    %27 = vector.broadcast %26 : f32 to vector<1x1xf32>
    %cst_18 = arith.constant 2.560000e+02 : f32
    %28 = vector.broadcast %cst_18 : f32 to vector<1x1xf32>
    %29 = arith.divf %27, %28 : vector<1x1xf32>
    %30 = vector.broadcast %29 : vector<1x1xf32> to vector<1x256xf32>
    %31 = arith.subf %0, %30 : vector<1x256xf32>
    %32 = arith.mulf %31, %31 : vector<1x256xf32>
    %33 = vector.shape_cast %32 : vector<1x256xf32> to vector<1x1x256xf32>
    %cst_19 = arith.constant dense<0.000000e+00> : vector<1xf32>
    %34 = vector.multi_reduction <add>, %33, %cst_19 [1, 2] : vector<1x1x256xf32> to vector<1xf32>
    %35 = vector.shape_cast %34 : vector<1xf32> to vector<1x1x1xf32>
    %36 = vector.extract %35[0, 0, 0] : f32 from vector<1x1x1xf32>
    %37 = vector.broadcast %36 : f32 to vector<1x1xf32>
    %cst_20 = arith.constant 2.550000e+02 : f32
    %38 = vector.broadcast %cst_20 : f32 to vector<1x1xf32>
    %39 = arith.divf %37, %38 : vector<1x1xf32>
    %40 = math.sqrt %39 : vector<1x1xf32>
    %41 = vector.shape_cast %22 : vector<1x128xf32> to vector<1x1x128xf32>
    %cst_21 = arith.constant dense<0.000000e+00> : vector<1xf32>
    %42 = vector.multi_reduction <add>, %41, %cst_21 [1, 2] : vector<1x1x128xf32> to vector<1xf32>
    %43 = vector.shape_cast %42 : vector<1xf32> to vector<1x1x1xf32>
    %44 = vector.extract %43[0, 0, 0] : f32 from vector<1x1x1xf32>
    %45 = vector.broadcast %44 : f32 to vector<1x1xf32>
    %cst_22 = arith.constant 1.280000e+02 : f32
    %46 = vector.broadcast %cst_22 : f32 to vector<1x1xf32>
    %47 = arith.divf %45, %46 : vector<1x1xf32>
    %48 = vector.broadcast %47 : vector<1x1xf32> to vector<1x128xf32>
    %49 = arith.subf %22, %48 : vector<1x128xf32>
    %50 = arith.mulf %49, %49 : vector<1x128xf32>
    %51 = vector.shape_cast %50 : vector<1x128xf32> to vector<1x1x128xf32>
    %cst_23 = arith.constant dense<0.000000e+00> : vector<1xf32>
    %52 = vector.multi_reduction <add>, %51, %cst_23 [1, 2] : vector<1x1x128xf32> to vector<1xf32>
    %53 = vector.shape_cast %52 : vector<1xf32> to vector<1x1x1xf32>
    %54 = vector.extract %53[0, 0, 0] : f32 from vector<1x1x1xf32>
    %55 = vector.broadcast %54 : f32 to vector<1x1xf32>
    %cst_24 = arith.constant 1.270000e+02 : f32
    %56 = vector.broadcast %cst_24 : f32 to vector<1x1xf32>
    %57 = arith.divf %55, %56 : vector<1x1xf32>
    %58 = math.rsqrt %57 : vector<1x1xf32>
    %59 = vector.broadcast %47 : vector<1x1xf32> to vector<1x128xf32>
    %60 = arith.subf %22, %59 : vector<1x128xf32>
    %61 = vector.broadcast %40 : vector<1x1xf32> to vector<1x128xf32>
    %62 = arith.mulf %61, %60 : vector<1x128xf32>
    %63 = vector.broadcast %58 : vector<1x1xf32> to vector<1x128xf32>
    %64 = arith.mulf %62, %63 : vector<1x128xf32>
    %65 = vector.broadcast %29 : vector<1x1xf32> to vector<1x128xf32>
    %66 = arith.addf %64, %65 : vector<1x128xf32>
    tpu.wait_dma2 semaphore(%arg11 : memref<!tpu.dma_semaphore, #tpu.memory_space<semaphore_mem>>) src(%arg8 : memref<512x512xbf16, #tpu.memory_space<any>>) dst(%arg10 : memref<512x512xbf16, #tpu.memory_space<vmem>>)
    %67 = tpu.concatenate %6, %0 in 1 : vector<1x256xf32>, vector<1x256xf32> -> vector<1x512xf32>
    %c0_25 = arith.constant 0 : index
    %c0_26 = arith.constant 0 : index
    %68 = vector.load %arg10[%c0_25, %c0_26] : memref<512x512xbf16, #tpu.memory_space<vmem>>, vector<512x512xbf16>
    %69 = arith.truncf %67 : vector<1x512xf32> to vector<1x512xbf16>
    %cst_27 = arith.constant dense<0.000000e+00> : vector<1x512xf32>
    %70 = tpu.matmul %69, %68, %cst_27 {dimension_numbers = #tpu.dot_dimension_numbers<[1], [0], [0], [1], [0, 0, 1, 1], [], []>} : vector<1x512xbf16>, vector<512x512xbf16>, vector<1x512xf32> -> vector<1x512xf32>
    %c0_28 = arith.constant 0 : index
    %c256 = arith.constant 256 : index
    %71 = vector.load %arg7[%c0_28, %c256] : memref<1x1536xf32, #tpu.memory_space<vmem>>, vector<1x512xf32>
    %72 = arith.addf %70, %71 : vector<1x512xf32>
    %73 = arith.negf %72 : vector<1x512xf32>
    %74 = math.exp %73 : vector<1x512xf32>
    %cst_29 = arith.constant 1.000000e+00 : f32
    %75 = vector.broadcast %cst_29 : f32 to vector<1x512xf32>
    %76 = arith.addf %75, %74 : vector<1x512xf32>
    %77 = arith.divf %75, %76 : vector<1x512xf32>
    %c0_30 = arith.constant 0 : index
    %c0_31 = arith.constant 0 : index
    %78 = vector.load %arg4[%c0_30, %c0_31] : memref<512x128xbf16, #tpu.memory_space<vmem>>, vector<512x128xbf16>
    %79 = arith.truncf %77 : vector<1x512xf32> to vector<1x512xbf16>
    %cst_32 = arith.constant dense<0.000000e+00> : vector<1x128xf32>
    %80 = tpu.matmul %79, %78, %cst_32 {dimension_numbers = #tpu.dot_dimension_numbers<[1], [0], [0], [1], [0, 0, 1, 1], [], []>} : vector<1x512xbf16>, vector<512x128xbf16>, vector<1x128xf32> -> vector<1x128xf32>
    %c0_33 = arith.constant 0 : index
    %c768 = arith.constant 768 : index
    %81 = vector.load %arg7[%c0_33, %c768] : memref<1x1536xf32, #tpu.memory_space<vmem>>, vector<1x128xf32>
    %82 = arith.addf %80, %81 : vector<1x128xf32>
    %83 = arith.negf %82 : vector<1x128xf32>
    %84 = math.exp %83 : vector<1x128xf32>
    %cst_34 = arith.constant 1.000000e+00 : f32
    %85 = vector.broadcast %cst_34 : f32 to vector<1x128xf32>
    %86 = arith.addf %85, %84 : vector<1x128xf32>
    %87 = arith.divf %85, %86 : vector<1x128xf32>
    %c0_35 = arith.constant 0 : index
    %c0_36 = arith.constant 0 : index
    %88 = vector.load %arg6[%c0_35, %c0_36] : memref<128x640xbf16, #tpu.memory_space<vmem>>, vector<128x128xbf16>
    %89 = arith.truncf %87 : vector<1x128xf32> to vector<1x128xbf16>
    %cst_37 = arith.constant dense<0.000000e+00> : vector<1x128xf32>
    %90 = tpu.matmul %89, %88, %cst_37 {dimension_numbers = #tpu.dot_dimension_numbers<[1], [0], [0], [1], [0, 0, 1, 1], [], []>} : vector<1x128xbf16>, vector<128x128xbf16>, vector<1x128xf32> -> vector<1x128xf32>
    %c0_38 = arith.constant 0 : index
    %c896 = arith.constant 896 : index
    %91 = vector.load %arg7[%c0_38, %c896] : memref<1x1536xf32, #tpu.memory_space<vmem>>, vector<1x128xf32>
    %92 = arith.addf %90, %91 : vector<1x128xf32>
    %c0_39 = arith.constant 0 : index
    %c256_40 = arith.constant 256 : index
    %93 = vector.load %arg6[%c0_39, %c256_40] : memref<128x640xbf16, #tpu.memory_space<vmem>>, vector<128x128xbf16>
    %94 = arith.truncf %92 : vector<1x128xf32> to vector<1x128xbf16>
    %cst_41 = arith.constant dense<0.000000e+00> : vector<1x128xf32>
    %95 = tpu.matmul %94, %93, %cst_41 {dimension_numbers = #tpu.dot_dimension_numbers<[1], [0], [0], [1], [0, 0, 1, 1], [], []>} : vector<1x128xbf16>, vector<128x128xbf16>, vector<1x128xf32> -> vector<1x128xf32>
    %c0_42 = arith.constant 0 : index
    %c384 = arith.constant 384 : index
    %96 = vector.load %arg6[%c0_42, %c384] : memref<128x640xbf16, #tpu.memory_space<vmem>>, vector<128x128xbf16>
    %97 = arith.truncf %66 : vector<1x128xf32> to vector<1x128xbf16>
    %cst_43 = arith.constant dense<0.000000e+00> : vector<1x128xf32>
    %98 = tpu.matmul %97, %96, %cst_43 {dimension_numbers = #tpu.dot_dimension_numbers<[1], [0], [0], [1], [0, 0, 1, 1], [], []>} : vector<1x128xbf16>, vector<128x128xbf16>, vector<1x128xf32> -> vector<1x128xf32>
    %99 = arith.addf %95, %98 : vector<1x128xf32>
    %c0_44 = arith.constant 0 : index
    %c1280 = arith.constant 1280 : index
    %100 = vector.load %arg7[%c0_44, %c1280] : memref<1x1536xf32, #tpu.memory_space<vmem>>, vector<1x128xf32>
    %101 = arith.addf %99, %100 : vector<1x128xf32>
    %102 = arith.negf %101 : vector<1x128xf32>
    %103 = math.exp %102 : vector<1x128xf32>
    %cst_45 = arith.constant 1.000000e+00 : f32
    %104 = vector.broadcast %cst_45 : f32 to vector<1x128xf32>
    %105 = arith.addf %104, %103 : vector<1x128xf32>
    %106 = arith.divf %104, %105 : vector<1x128xf32>
    %c0_46 = arith.constant 0 : index
    %c512 = arith.constant 512 : index
    %107 = vector.load %arg6[%c0_46, %c512] : memref<128x640xbf16, #tpu.memory_space<vmem>>, vector<128x128xbf16>
    %108 = arith.truncf %106 : vector<1x128xf32> to vector<1x128xbf16>
    %cst_47 = arith.constant dense<0.000000e+00> : vector<1x128xf32>
    %109 = tpu.matmul %108, %107, %cst_47 {dimension_numbers = #tpu.dot_dimension_numbers<[1], [0], [0], [1], [0, 0, 1, 1], [], []>} : vector<1x128xbf16>, vector<128x128xbf16>, vector<1x128xf32> -> vector<1x128xf32>
    %c0_48 = arith.constant 0 : index
    %c1408 = arith.constant 1408 : index
    %110 = vector.load %arg7[%c0_48, %c1408] : memref<1x1536xf32, #tpu.memory_space<vmem>>, vector<1x128xf32>
    %111 = arith.addf %109, %110 : vector<1x128xf32>
    %c0_49 = arith.constant 0 : index
    %c0_50 = arith.constant 0 : index
    %112 = vector.load %arg9[%c0_49, %c0_50] : memref<1x128xf32, #tpu.memory_space<vmem>>, vector<1x128xf32>
    tpu.vector_store %arg9[%c0_49, %c0_50], %111 {strides = array<i32>} : memref<1x128xf32, #tpu.memory_space<vmem>>, vector<1x128xf32>,
    return
  }
}

</mosaic_0001>

<llo_original>
// kernel: embedding_forward.1
$region0: #{embedding_forward.1}
  #allocation0 [shape = 'u32[]', space=smem, size = 0x4, offset = 0x4, fixed_abs, tag = 'smem constant byte address 0x4 - core index']
  #allocation1 [shape = 'u32[144,128]{1,0:T(1,128)}', space=vmem, size = 0x12000, scoped, tag = 'internal scratch']
  #allocation2 [shape = 'bf16[512,512]{1,0:T(16,128)(2,1)}', space=vmem, size = 0x80000, scoped, tag = 'scratch operand']
  #allocation3 [shape = 's32[1]{0}', space=sflag, size = 0x4, scoped, tag = 'scratch operand']
  #allocation10 [shape = 's32[]', space=sflag, size = 0x4, offset = 0, fixed_abs, tag = 'sflag constant byte address 0x0 - dummy sync flag']
  %s0 = inlined_call_operand.vmem [shape: f32[1,256], index: 0, kind: input, shape index: {}]
  %s1 = inlined_call_operand.vmem [shape: f32[1,48], index: 1, kind: input, shape index: {}]
  %s2 = inlined_call_operand.vmem [shape: f32[1,128], index: 2, kind: input, shape index: {}]
  %s3 = inlined_call_operand.vmem [shape: bf16[48,256], index: 3, kind: input, shape index: {}]
  %s4 = inlined_call_operand.hbm [shape: bf16[512,128], index: 4, kind: input, shape index: {}]
  %s5 = inlined_call_operand.vmem [shape: bf16[128,128], index: 5, kind: input, shape index: {}]
  %s6 = inlined_call_operand.hbm [shape: bf16[128,640], index: 6, kind: input, shape index: {}]
  %s7 = inlined_call_operand.vmem [shape: f32[1,1536], index: 7, kind: input, shape index: {}]
  %s8 = inlined_call_operand.hbm [shape: bf16[512,512], index: 8, kind: input, shape index: {}]
  %s9 = inlined_call_operand.hbm [shape: f32[1,128], index: 9, kind: output, shape index: {}]
  %s10 = sld [smem:[#allocation0]]
  $region50: #{embedding_forward.1} parent=0
    _
  %s12 = ssub.s32 1, %s10
  %s13 = scalar_select 0, %s12, %s10
  $region1: #{embedding_forward.1} parent=0
    #allocation4 [shape = 'u8[131072]{0}', space=vmem, size = 0x20000, scoped, tag = 'input window, operand 4, single buffered']
    #allocation5 [shape = 's32[1]{0}', space=sflag, size = 0x4, scoped, tag = 'scoped memory for embedding_forward.1']
    #allocation6 [shape = 's32[1]{0}', space=sflag, size = 0x4, scoped, tag = 'scoped memory for embedding_forward.1']
    #allocation7 [shape = 'u8[163840]{0}', space=vmem, size = 0x28000, scoped, tag = 'input window, operand 6, single buffered']
    #allocation8 [shape = 's32[1]{0}', space=sflag, size = 0x4, scoped, tag = 'scoped memory for embedding_forward.1']
    #allocation9 [shape = 'u8[512]{0}', space=vmem, size = 0x400, scoped, tag = 'output window, operand 0, single buffered']
    #allocation11 [shape = 'u32[9]{0}', space=smem, size = 0x24, scoped, tag = 'DMA stride descriptor']
    %14 = vsyncpa [#allocation5], 0
    %15 = vsyncpa [#allocation8], 0
    %16 = vsyncpa [#allocation6], 0
    // Predicated region
    $region2: #{embedding_forward.1} parent=1 // pred_check
      _
    $region3: #{embedding_forward.1} parent=1 // pred_check_branch
      %18 = sbr.rel (0) target = $region5
    $region4: #{embedding_forward.1} parent=1 // pred_region
      _
    $region5: #{embedding_forward.1} parent=1 // pred_fallthru
      _
    // Predicated region
    $region6: #{embedding_forward.1} parent=1 // pred_check
      _
    $region7: #{embedding_forward.1} parent=1 // pred_check_branch
      %20 = sbr.rel (0) target = $region9
    $region8: #{embedding_forward.1} parent=1 // pred_region
      _
    $region9: #{embedding_forward.1} parent=1 // pred_fallthru
      _
    // Predicated region
    $region10: #{embedding_forward.1} parent=1 // pred_check
      _
    $region11: #{embedding_forward.1} parent=1 // pred_check_branch
      %22 = sbr.rel (0) target = $region13
    $region12: #{embedding_forward.1} parent=1 // pred_region
      _
    $region13: #{embedding_forward.1} parent=1 // pred_fallthru
      _
    // Predicated region
    $region14: #{embedding_forward.1} parent=1 // pred_check
      _
    $region15: #{embedding_forward.1} parent=1 // pred_check_branch
      %24 = sbr.rel (0) target = $region17
    $region16: #{embedding_forward.1} parent=1 // pred_region
      _
    $region17: #{embedding_forward.1} parent=1 // pred_fallthru
      _
    // Predicated region
    $region18: #{embedding_forward.1} parent=1 // pred_check
      _
    $region19: #{embedding_forward.1} parent=1 // pred_check_branch
      %26 = sbr.rel (0) target = $region21
    $region20: #{embedding_forward.1} parent=1 // pred_region
      %s28 = ssub.s32 4096, 4096
      %29 = vsyncadd [#allocation5], %s28
      %s30 = sshll.u32 [#allocation4], 4
      %s31 = int_to_ptr.vmem [resolvable:$true] %s30
      %36 = dma.hbm_to_vmem [thread:$0]  %s4, 4096, %s31, [#allocation5], 64, 64, 4
    $region21: #{embedding_forward.1} parent=1 // pred_fallthru
      _
    // Predicated region
    $region22: #{embedding_forward.1} parent=1 // pred_check
      _
    $region23: #{embedding_forward.1} parent=1 // pred_check_branch
      %38 = sbr.rel (0) target = $region25
    $region24: #{embedding_forward.1} parent=1 // pred_region
      _
    $region25: #{embedding_forward.1} parent=1 // pred_fallthru
      _
    // Predicated region
    $region26: #{embedding_forward.1} parent=1 // pred_check
      _
    $region27: #{embedding_forward.1} parent=1 // pred_check_branch
      %40 = sbr.rel (0) target = $region29
    $region28: #{embedding_forward.1} parent=1 // pred_region
      %s42 = ssub.s32 5120, 5120
      %43 = vsyncadd [#allocation8], %s42
      %s44 = sshll.u32 [#allocation7], 4
      %s45 = int_to_ptr.vmem [resolvable:$true] %s44
      %50 = dma.hbm_to_vmem [thread:$0]  %s6, 5120, %s45, [#allocation8], 320, 320, 20
    $region29: #{embedding_forward.1} parent=1 // pred_fallthru
      _
    // Predicated region
    $region30: #{embedding_forward.1} parent=1 // pred_check
      _
    $region31: #{embedding_forward.1} parent=1 // pred_check_branch
      %52 = sbr.rel (0) target = $region33
    $region32: #{embedding_forward.1} parent=1 // pred_region
      _
    $region33: #{embedding_forward.1} parent=1 // pred_fallthru
      _
    // Predicated region
    $region34: #{embedding_forward.1} parent=1 // pred_check
      _
    $region35: #{embedding_forward.1} parent=1 // pred_check_branch
      %54 = sbr.rel (0) target = $region37
    $region36: #{embedding_forward.1} parent=1 // pred_region
      %55 = dma.done [#allocation5], 4096
    $region37: #{embedding_forward.1} parent=1 // pred_fallthru
      _
    // Predicated region
    $region38: #{embedding_forward.1} parent=1 // pred_check
      _
    $region39: #{embedding_forward.1} parent=1 // pred_check_branch
      %57 = sbr.rel (0) target = $region41
    $region40: #{embedding_forward.1} parent=1 // pred_region
      %58 = dma.done [#allocation8], 5120
    $region41: #{embedding_forward.1} parent=1 // pred_fallthru
      _
    %s61 = sshll.u32 1, 14
    %s62 = sxor.u32 4294967295, %s61
    %s64 = sld [smem:[#allocation0]]
    %s65 = sadd.s32 2, %s64
    %s67 = sshll.u32 7, 26
    %s68 = sxor.u32 4294967295, %s67
    %s69 = sand.u32 0, %s68
    %s70 = sshll.u32 %s65, 26
    %s71 = sor.u32 %s69, %s70
    %s72 = sshll.u32 [#allocation2], 4
    %s73 = int_to_ptr.vmem [resolvable:$true] %s72
    %76 = sst [smem:[#allocation11]] 512
    %s77 = scalar_lea.smem [#allocation11], 1
    %78 = sst [smem:[%s77]] 512
    %s79 = scalar_lea.smem [#allocation11], 2
    %80 = sst [smem:[%s79]] 4
    %s81 = scalar_lea.smem [#allocation11], 3
    %82 = sst [smem:[%s81]] 64
    %s83 = scalar_lea.smem [#allocation11], 4
    %84 = sst [smem:[%s83]] 128
    %s85 = scalar_lea.smem [#allocation11], 5
    %86 = sst [smem:[%s85]] 2
    %s87 = scalar_lea.smem [#allocation11], 6
    %88 = sst [smem:[%s87]] 256
    %s89 = scalar_lea.smem [#allocation11], 7
    %90 = sst [smem:[%s89]] 64
    %s91 = scalar_lea.smem [#allocation11], 8
    %92 = sst [smem:[%s91]] 4
    %94 = dma.general %s8, 16384, %s73, [#allocation3], [#allocation10], [#allocation11], %s71, 0
    %v95 = vld [vmem:[%s0] sm:$0x3]
    %v96 = vld [vmem:[%s1] sm:$0x1]
    %v97 = vld [vmem:[%s3] sm:$0xff]
    %v98 = vld [vmem:[%s3 + $0x8] sm:$0xff]
    %v99 = vld [vmem:[%s3 + $0x10] sm:$0xff]
    %v100 = vld [vmem:[%s3 + $0x18] sm:$0xff]
    %v101 = vld [vmem:[%s3 + $0x20] sm:$0xff]
    %v102 = vld [vmem:[%s3 + $0x28] sm:$0xff]
    %v103 = vpack.c.bf16 %v96, %v96
    %v104 = vld [vmem:[%s7] sm:$0x3]
    %v111 = vunpack.c.l.b16 %v97
    %v112 = vunpack.c.h.b16 %v97
    %v113 = vunpack.c.l.b16 %v98
    %v114 = vunpack.c.h.b16 %v98
    %v115 = vunpack.c.l.b16 %v99
    %v116 = vunpack.c.h.b16 %v99
    %v117 = vunpack.c.l.b16 %v100
    %v118 = vunpack.c.h.b16 %v100
    %v119 = vunpack.c.l.b16 %v101
    %v120 = vunpack.c.h.b16 %v101
    %v121 = vunpack.c.l.b16 %v102
    %v122 = vunpack.c.h.b16 %v102
    %v123 = vpack.c.b16 %v113, %v111
    %v124 = vpack.c.b16 %v114, %v112
    %v125 = vpack.c.b16 %v117, %v115
    %v126 = vpack.c.b16 %v118, %v116
    %v127 = vpack.c.b16 %v121, %v119
    %v128 = vpack.c.b16 %v122, %v120
    %v136 = vlaneseq
    %v137 = vshrl.u32 %v136, 7
    %v138 = vsub.s32 0, %v137
    %v139 = vrot.slane %v104, %v138
    %v140 = vlaneseq
    %v141 = vshrl.u32 %v140, 7
    %v142 = vsub.s32 1, %v141
    %v143 = vrot.slane %v104, %v142
    %vm146 = vcmask 392192
    %v148 = vsel %vm146, %v103, 0
    %150 = vmatprep.subr.bf16.mxu0 %v124
    %151 = vmatpush1.bf16.msra.mxu0 %v123
    %152 = vmatprep.subr.bf16.mxu0 %v126
    %153 = vmatpush1.bf16.msra.mxu0 %v125
    %154 = vmatprep.subr.bf16.mxu0 %v128
    %155 = vmatpush1.bf16.msra.mxu0 %v127
    %156 = vmatprep.subr.bf16.mxu0 0
    %157 = vmatpush1.bf16.msra.mxu0 0
    %158 = vmatprep.subr.bf16.mxu0 0
    %159 = vmatpush1.bf16.msra.mxu0 0
    %160 = vmatprep.subr.bf16.mxu0 0
    %161 = vmatpush1.bf16.msra.mxu0 0
    %162 = vmatprep.subr.bf16.mxu0 0
    %163 = vmatpush1.bf16.msra.mxu0 0
    %164 = vmatprep.subr.bf16.mxu0 0
    %165 = vmatpush1.bf16.msra.mxu0 0
    %166 = vmatprep.subr.bf16.mxu0 0
    %167 = vmatpush1.bf16.msra.mxu0 0
    %168 = vmatprep.subr.bf16.mxu0 0
    %169 = vmatpush1.bf16.msra.mxu0 0
    %170 = vmatprep.subr.bf16.mxu0 0
    %171 = vmatpush1.bf16.msra.mxu0 0
    %172 = vmatprep.subr.bf16.mxu0 0
    %173 = vmatpush1.bf16.msra.mxu0 0
    %174 = vmatprep.subr.bf16.mxu0 0
    %175 = vmatpush1.bf16.msra.mxu0 0
    %176 = vmatprep.subr.bf16.mxu0 0
    %177 = vmatpush1.bf16.msra.mxu0 0
    %178 = vmatprep.subr.bf16.mxu0 0
    %179 = vmatpush1.bf16.msra.mxu0 0
    %180 = vmatprep.subr.bf16.mxu0 0
    %181 = vmatpush1.bf16.msra.mxu0 0
    %182 = vmatprep.mubr.bf16.mxu0 0
    %183 = vmatmul.mubr.bf16.gmra.mrb[0].mxu0 %v148
    %v184 = vpop.f32.mrb[0].mxu0
    %v185 = vadd.f32 %v139, %v184
    %v186 = vpop.f32.mrb[0].mxu0
    %v187 = vadd.f32 %v143, %v186
    %v188 = vpop.f32.mrb[0].mxu0
    %v189 = vpop.f32.mrb[0].mxu0
    %190 = vdwg.mxu0
    %v191 = vld [vmem:[%s2] sm:$0x1]
    %v192 = vld [vmem:[%s5] sm:$0xf]
    %v193 = vld [vmem:[%s5 + $0x4] sm:$0xf]
    %v194 = vld [vmem:[%s5 + $0x8] sm:$0xf]
    %v195 = vld [vmem:[%s5 + $0xc] sm:$0xf]
    %v196 = vld [vmem:[%s5 + $0x10] sm:$0xf]
    %v197 = vld [vmem:[%s5 + $0x14] sm:$0xf]
    %v198 = vld [vmem:[%s5 + $0x18] sm:$0xf]
    %v199 = vld [vmem:[%s5 + $0x1c] sm:$0xf]
    %v200 = vld [vmem:[%s5 + $0x20] sm:$0xf]
    %v201 = vld [vmem:[%s5 + $0x24] sm:$0xf]
    %v202 = vld [vmem:[%s5 + $0x28] sm:$0xf]
    %v203 = vld [vmem:[%s5 + $0x2c] sm:$0xf]
    %v204 = vld [vmem:[%s5 + $0x30] sm:$0xf]
    %v205 = vld [vmem:[%s5 + $0x34] sm:$0xf]
    %v206 = vld [vmem:[%s5 + $0x38] sm:$0xf]
    %v207 = vld [vmem:[%s5 + $0x3c] sm:$0xf]
    %v208 = vpack.c.bf16 %v191, %v191
    %v209 = vld [vmem:[%s7 + $0x8] sm:$0x1]
    %v226 = vunpack.c.l.b16 %v192
    %v227 = vunpack.c.l.b16 %v193
    %v228 = vunpack.c.l.b16 %v194
    %v229 = vunpack.c.l.b16 %v195
    %v230 = vunpack.c.l.b16 %v196
    %v231 = vunpack.c.l.b16 %v197
    %v232 = vunpack.c.l.b16 %v198
    %v233 = vunpack.c.l.b16 %v199
    %v234 = vunpack.c.l.b16 %v200
    %v235 = vunpack.c.l.b16 %v201
    %v236 = vunpack.c.l.b16 %v202
    %v237 = vunpack.c.l.b16 %v203
    %v238 = vunpack.c.l.b16 %v204
    %v239 = vunpack.c.l.b16 %v205
    %v240 = vunpack.c.l.b16 %v206
    %v241 = vunpack.c.l.b16 %v207
    %v242 = vpack.c.b16 %v227, %v226
    %v243 = vpack.c.b16 %v229, %v228
    %v244 = vpack.c.b16 %v231, %v230
    %v245 = vpack.c.b16 %v233, %v232
    %v246 = vpack.c.b16 %v235, %v234
    %v247 = vpack.c.b16 %v237, %v236
    %v248 = vpack.c.b16 %v239, %v238
    %v249 = vpack.c.b16 %v241, %v240
    %258 = vmatprep.subr.bf16.mxu0 0
    %259 = vmatpush1.bf16.msra.mxu0 %v242
    %260 = vmatprep.subr.bf16.mxu0 0
    %261 = vmatpush1.bf16.msra.mxu0 %v243
    %262 = vmatprep.subr.bf16.mxu0 0
    %263 = vmatpush1.bf16.msra.mxu0 %v244
    %264 = vmatprep.subr.bf16.mxu0 0
    %265 = vmatpush1.bf16.msra.mxu0 %v245
    %266 = vmatprep.subr.bf16.mxu0 0
    %267 = vmatpush1.bf16.msra.mxu0 %v246
    %268 = vmatprep.subr.bf16.mxu0 0
    %269 = vmatpush1.bf16.msra.mxu0 %v247
    %270 = vmatprep.subr.bf16.mxu0 0
    %271 = vmatpush1.bf16.msra.mxu0 %v248
    %272 = vmatprep.subr.bf16.mxu0 0
    %273 = vmatpush1.bf16.msra.mxu0 %v249
    %274 = vmatprep.subr.bf16.mxu0 0
    %275 = vmatpush1.bf16.msra.mxu0 0
    %276 = vmatprep.subr.bf16.mxu0 0
    %277 = vmatpush1.bf16.msra.mxu0 0
    %278 = vmatprep.subr.bf16.mxu0 0
    %279 = vmatpush1.bf16.msra.mxu0 0
    %280 = vmatprep.subr.bf16.mxu0 0
    %281 = vmatpush1.bf16.msra.mxu0 0
    %282 = vmatprep.subr.bf16.mxu0 0
    %283 = vmatpush1.bf16.msra.mxu0 0
    %284 = vmatprep.subr.bf16.mxu0 0
    %285 = vmatpush1.bf16.msra.mxu0 0
    %286 = vmatprep.subr.bf16.mxu0 0
    %287 = vmatpush1.bf16.msra.mxu0 0
    %288 = vmatprep.subr.bf16.mxu0 0
    %289 = vmatpush1.bf16.msra.mxu0 0
    %290 = vmatprep.mubr.bf16.mxu0 0
    %291 = vmatmul.mubr.bf16.gmra.mrb[0].mxu0 %v208
    %v292 = vpop.f32.mrb[0].mxu0
    %v293 = vadd.f32 %v209, %v292
    %v294 = vpop.f32.mrb[0].mxu0
    %v295 = vpop.f32.mrb[0].mxu0
    %v296 = vpop.f32.mrb[0].mxu0
    %297 = vdwg.mxu0
    %v298 = vxor.u32 %v293, 2147483648
    %v299 = vmul.f32 %v298, 1.442695
    %v300 = vpow.pop %v299
    %v301 = vadd.f32 %v300, 1.0
    %v302 = vrcp.pop %v301
    %v303 = vmul.f32 1.0, %v302
    %v304 = vld [vmem:[#allocation7 + $0x4] sm:$0xf]
    %v305 = vld [vmem:[#allocation7 + $0x18] sm:$0xf]
    %v306 = vld [vmem:[#allocation7 + $0x2c] sm:$0xf]
    %v307 = vld [vmem:[#allocation7 + $0x40] sm:$0xf]
    %v308 = vld [vmem:[#allocation7 + $0x54] sm:$0xf]
    %v309 = vld [vmem:[#allocation7 + $0x68] sm:$0xf]
    %v310 = vld [vmem:[#allocation7 + $0x7c] sm:$0xf]
    %v311 = vld [vmem:[#allocation7 + $0x90] sm:$0xf]
    %v312 = vld [vmem:[#allocation7 + $0xa4] sm:$0xf]
    %v313 = vld [vmem:[#allocation7 + $0xb8] sm:$0xf]
    %v314 = vld [vmem:[#allocation7 + $0xcc] sm:$0xf]
    %v315 = vld [vmem:[#allocation7 + $0xe0] sm:$0xf]
    %v316 = vld [vmem:[#allocation7 + $0xf4] sm:$0xf]
    %v317 = vld [vmem:[#allocation7 + $0x108] sm:$0xf]
    %v318 = vld [vmem:[#allocation7 + $0x11c] sm:$0xf]
    %v319 = vld [vmem:[#allocation7 + $0x130] sm:$0xf]
    %v320 = vpack.c.bf16 %v303, %v303
    %v321 = vld [vmem:[%s7 + $0x9] sm:$0x1]
    %v338 = vunpack.c.l.b16 %v304
    %v339 = vunpack.c.l.b16 %v305
    %v340 = vunpack.c.l.b16 %v306
    %v341 = vunpack.c.l.b16 %v307
    %v342 = vunpack.c.l.b16 %v308
    %v343 = vunpack.c.l.b16 %v309
    %v344 = vunpack.c.l.b16 %v310
    %v345 = vunpack.c.l.b16 %v311
    %v346 = vunpack.c.l.b16 %v312
    %v347 = vunpack.c.l.b16 %v313
    %v348 = vunpack.c.l.b16 %v314
    %v349 = vunpack.c.l.b16 %v315
    %v350 = vunpack.c.l.b16 %v316
    %v351 = vunpack.c.l.b16 %v317
    %v352 = vunpack.c.l.b16 %v318
    %v353 = vunpack.c.l.b16 %v319
    %v354 = vpack.c.b16 %v339, %v338
    %v355 = vpack.c.b16 %v341, %v340
    %v356 = vpack.c.b16 %v343, %v342
    %v357 = vpack.c.b16 %v345, %v344
    %v358 = vpack.c.b16 %v347, %v346
    %v359 = vpack.c.b16 %v349, %v348
    %v360 = vpack.c.b16 %v351, %v350
    %v361 = vpack.c.b16 %v353, %v352
    %370 = vmatprep.subr.bf16.mxu0 0
    %371 = vmatpush1.bf16.msra.mxu0 %v354
    %372 = vmatprep.subr.bf16.mxu0 0
    %373 = vmatpush1.bf16.msra.mxu0 %v355
    %374 = vmatprep.subr.bf16.mxu0 0
    %375 = vmatpush1.bf16.msra.mxu0 %v356
    %376 = vmatprep.subr.bf16.mxu0 0
    %377 = vmatpush1.bf16.msra.mxu0 %v357
    %378 = vmatprep.subr.bf16.mxu0 0
    %379 = vmatpush1.bf16.msra.mxu0 %v358
    %380 = vmatprep.subr.bf16.mxu0 0
    %381 = vmatpush1.bf16.msra.mxu0 %v359
    %382 = vmatprep.subr.bf16.mxu0 0
    %383 = vmatpush1.bf16.msra.mxu0 %v360
    %384 = vmatprep.subr.bf16.mxu0 0
    %385 = vmatpush1.bf16.msra.mxu0 %v361
    %386 = vmatprep.subr.bf16.mxu0 0
    %387 = vmatpush1.bf16.msra.mxu0 0
    %388 = vmatprep.subr.bf16.mxu0 0
    %389 = vmatpush1.bf16.msra.mxu0 0
    %390 = vmatprep.subr.bf16.mxu0 0
    %391 = vmatpush1.bf16.msra.mxu0 0
    %392 = vmatprep.subr.bf16.mxu0 0
    %393 = vmatpush1.bf16.msra.mxu0 0
    %394 = vmatprep.subr.bf16.mxu0 0
    %395 = vmatpush1.bf16.msra.mxu0 0
    %396 = vmatprep.subr.bf16.mxu0 0
    %397 = vmatpush1.bf16.msra.mxu0 0
    %398 = vmatprep.subr.bf16.mxu0 0
    %399 = vmatpush1.bf16.msra.mxu0 0
    %400 = vmatprep.subr.bf16.mxu0 0
    %401 = vmatpush1.bf16.msra.mxu0 0
    %402 = vmatprep.mubr.bf16.mxu0 0
    %403 = vmatmul.mubr.bf16.gmra.mrb[0].mxu0 %v320
    %v404 = vpop.f32.mrb[0].mxu0
    %v405 = vadd.f32 %v321, %v404
    %v406 = vpop.f32.mrb[0].mxu0
    %v407 = vpop.f32.mrb[0].mxu0
    %v408 = vpop.f32.mrb[0].mxu0
    %409 = vdwg.mxu0
    %v411 = vlaneseq
    %v412 = vshrl.u32 %v411, 7
    %v413 = vsub.s32 0, %v412
    %v414 = vrot.slane %v95, %v413
    %v415 = vlaneseq
    %v416 = vshrl.u32 %v415, 7
    %v417 = vsub.s32 1, %v416
    %v418 = vrot.slane %v95, %v417
    %vm421 = vcmask 1040384
    %v422 = vsel %vm421, %v414, 0.0
    %v423 = vsel %vm421, %v418, 0.0
    %v424 = vadd.f32 %v422, %v423
    %425 = vadd.xlane.f32.xlu0 %v424
    %v426 = vpop.xlane.xlu0 %425
    %v427 = vrot.slane %v426, 4
    %v428 = vadd.f32 %v426, %v427
    %v429 = vrot.slane %v428, 2
    %v430 = vadd.f32 %v428, %v429
    %v431 = vrot.slane %v430, 1
    %v432 = vadd.f32 %v430, %v431
    %s433 = vtos %v432
    %v434 = vstv %s433
    %v435 = vrcp.pop 256.0
    %v436 = vmul.f32 %v434, %v435
    %v437 = vsub.f32 %v95, %v436
    %v438 = vmul.f32 %v437, %v437
    %v440 = vlaneseq
    %v441 = vshrl.u32 %v440, 7
    %v442 = vsub.s32 0, %v441
    %v443 = vrot.slane %v438, %v442
    %v444 = vlaneseq
    %v445 = vshrl.u32 %v444, 7
    %v446 = vsub.s32 1, %v445
    %v447 = vrot.slane %v438, %v446
    %v450 = vsel %vm421, %v443, 0.0
    %v451 = vsel %vm421, %v447, 0.0
    %v452 = vadd.f32 %v450, %v451
    %453 = vadd.xlane.f32.xlu0 %v452
    %v454 = vpop.xlane.xlu0 %453
    %v455 = vrot.slane %v454, 4
    %v456 = vadd.f32 %v454, %v455
    %v457 = vrot.slane %v456, 2
    %v458 = vadd.f32 %v456, %v457
    %v459 = vrot.slane %v458, 1
    %v460 = vadd.f32 %v458, %v459
    %s461 = vtos %v460
    %v462 = vstv %s461
    %v463 = vrcp.pop 255.0
    %v464 = vmul.f32 %v462, %v463
    %v465 = vrsqrt.pop %v464
    %v466 = vmul.f32 %v464, %v465
    %vm467 = vcmp.eq.f32.partialorder %v464, inf
    %v468 = vsel %vm467, %v464, %v466
    %vm469 = vcmp.eq.f32.partialorder %v464, 0.0
    %v470 = vand.u32 %v464, 2147483648
    %v471 = vsel %vm469, %v470, %v468
    %v472 = vsel %vm421, %v405, 0.0
    %473 = vadd.xlane.f32.xlu0 %v472
    %v474 = vpop.xlane.xlu0 %473
    %v475 = vrot.slane %v474, 4
    %v476 = vadd.f32 %v474, %v475
    %v477 = vrot.slane %v476, 2
    %v478 = vadd.f32 %v476, %v477
    %v479 = vrot.slane %v478, 1
    %v480 = vadd.f32 %v478, %v479
    %s481 = vtos %v480
    %v482 = vstv %s481
    %v483 = vrcp.pop 128.0
    %v484 = vmul.f32 %v482, %v483
    %v485 = vsub.f32 %v405, %v484
    %v486 = vmul.f32 %v485, %v485
    %v487 = vsel %vm421, %v486, 0.0
    %488 = vadd.xlane.f32.xlu0 %v487
    %v489 = vpop.xlane.xlu0 %488
    %v490 = vrot.slane %v489, 4
    %v491 = vadd.f32 %v489, %v490
    %v492 = vrot.slane %v491, 2
    %v493 = vadd.f32 %v491, %v492
    %v494 = vrot.slane %v493, 1
    %v495 = vadd.f32 %v493, %v494
    %s496 = vtos %v495
    %v497 = vstv %s496
    %v498 = vrcp.pop 127.0
    %v499 = vmul.f32 %v497, %v498
    %v500 = vrsqrt.pop %v499
    %v501 = vmul.f32 %v471, %v485
    %v502 = vmul.f32 %v501, %v500
    %v503 = vadd.f32 %v502, %v436
    %s504 = smul.u32 4, 64
    %s505 = smul.u32 %s504, 4
    %s506 = sshll.u32 %s505, 4
    %507 = dma.done [#allocation3], %s506
    %v508 = vld [vmem:[#allocation2] sm:$0xff]
    %v509 = vld [vmem:[#allocation2 + $0x8] sm:$0xff]
    %v510 = vld [vmem:[#allocation2 + $0x10] sm:$0xff]
    %v511 = vld [vmem:[#allocation2 + $0x18] sm:$0xff]
    %v512 = vld [vmem:[#allocation2 + $0x20] sm:$0xff]
    %v513 = vld [vmem:[#allocation2 + $0x28] sm:$0xff]
    %v514 = vld [vmem:[#allocation2 + $0x30] sm:$0xff]
    %v515 = vld [vmem:[#allocation2 + $0x38] sm:$0xff]
    %v516 = vld [vmem:[#allocation2 + $0x40] sm:$0xff]
    %v517 = vld [vmem:[#allocation2 + $0x48] sm:$0xff]
    %v518 = vld [vmem:[#allocation2 + $0x50] sm:$0xff]
    %v519 = vld [vmem:[#allocation2 + $0x58] sm:$0xff]
    %v520 = vld [vmem:[#allocation2 + $0x60] sm:$0xff]
    %v521 = vld [vmem:[#allocation2 + $0x68] sm:$0xff]
    %v522 = vld [vmem:[#allocation2 + $0x70] sm:$0xff]
    %v523 = vld [vmem:[#allocation2 + $0x78] sm:$0xff]
    %v524 = vld [vmem:[#allocation2 + $0x80] sm:$0xff]
    %v525 = vld [vmem:[#allocation2 + $0x88] sm:$0xff]
    %v526 = vld [vmem:[#allocation2 + $0x90] sm:$0xff]
    %v527 = vld [vmem:[#allocation2 + $0x98] sm:$0xff]
    %v528 = vld [vmem:[#allocation2 + $0xa0] sm:$0xff]
    %v529 = vld [vmem:[#allocation2 + $0xa8] sm:$0xff]
    %v530 = vld [vmem:[#allocation2 + $0xb0] sm:$0xff]
    %v531 = vld [vmem:[#allocation2 + $0xb8] sm:$0xff]
    %v532 = vld [vmem:[#allocation2 + $0xc0] sm:$0xff]
    %v533 = vld [vmem:[#allocation2 + $0xc8] sm:$0xff]
    %v534 = vld [vmem:[#allocation2 + $0xd0] sm:$0xff]
    %v535 = vld [vmem:[#allocation2 + $0xd8] sm:$0xff]
    %v536 = vld [vmem:[#allocation2 + $0xe0] sm:$0xff]
    %v537 = vld [vmem:[#allocation2 + $0xe8] sm:$0xff]
    %v538 = vld [vmem:[#allocation2 + $0xf0] sm:$0xff]
    %v539 = vld [vmem:[#allocation2 + $0xf8] sm:$0xff]
    %v540 = vld [vmem:[#allocation2 + $0x100] sm:$0xff]
    %v541 = vld [vmem:[#allocation2 + $0x108] sm:$0xff]
    %v542 = vld [vmem:[#allocation2 + $0x110] sm:$0xff]
    %v543 = vld [vmem:[#allocation2 + $0x118] sm:$0xff]
    %v544 = vld [vmem:[#allocation2 + $0x120] sm:$0xff]
    %v545 = vld [vmem:[#allocation2 + $0x128] sm:$0xff]
    %v546 = vld [vmem:[#allocation2 + $0x130] sm:$0xff]
    %v547 = vld [vmem:[#allocation2 + $0x138] sm:$0xff]
    %v548 = vld [vmem:[#allocation2 + $0x140] sm:$0xff]
    %v549 = vld [vmem:[#allocation2 + $0x148] sm:$0xff]
    %v550 = vld [vmem:[#allocation2 + $0x150] sm:$0xff]
    %v551 = vld [vmem:[#allocation2 + $0x158] sm:$0xff]
    %v552 = vld [vmem:[#allocation2 + $0x160] sm:$0xff]
    %v553 = vld [vmem:[#allocation2 + $0x168] sm:$0xff]
    %v554 = vld [vmem:[#allocation2 + $0x170] sm:$0xff]
    %v555 = vld [vmem:[#allocation2 + $0x178] sm:$0xff]
    %v556 = vld [vmem:[#allocation2 + $0x180] sm:$0xff]
    %v557 = vld [vmem:[#allocation2 + $0x188] sm:$0xff]
    %v558 = vld [vmem:[#allocation2 + $0x190] sm:$0xff]
    %v559 = vld [vmem:[#allocation2 + $0x198] sm:$0xff]
    %v560 = vld [vmem:[#allocation2 + $0x1a0] sm:$0xff]
    %v561 = vld [vmem:[#allocation2 + $0x1a8] sm:$0xff]
    %v562 = vld [vmem:[#allocation2 + $0x1b0] sm:$0xff]
    %v563 = vld [vmem:[#allocation2 + $0x1b8] sm:$0xff]
    %v564 = vld [vmem:[#allocation2 + $0x1c0] sm:$0xff]
    %v565 = vld [vmem:[#allocation2 + $0x1c8] sm:$0xff]
    %v566 = vld [vmem:[#allocation2 + $0x1d0] sm:$0xff]
    %v567 = vld [vmem:[#allocation2 + $0x1d8] sm:$0xff]
    %v568 = vld [vmem:[#allocation2 + $0x1e0] sm:$0xff]
    %v569 = vld [vmem:[#allocation2 + $0x1e8] sm:$0xff]
    %v570 = vld [vmem:[#allocation2 + $0x1f0] sm:$0xff]
    %v571 = vld [vmem:[#allocation2 + $0x1f8] sm:$0xff]
    %v572 = vld [vmem:[#allocation2 + $0x200] sm:$0xff]
    %v573 = vld [vmem:[#allocation2 + $0x208] sm:$0xff]
    %v574 = vld [vmem:[#allocation2 + $0x210] sm:$0xff]
    %v575 = vld [vmem:[#allocation2 + $0x218] sm:$0xff]
    %v576 = vld [vmem:[#allocation2 + $0x220] sm:$0xff]
    %v577 = vld [vmem:[#allocation2 + $0x228] sm:$0xff]
    %v578 = vld [vmem:[#allocation2 + $0x230] sm:$0xff]
    %v579 = vld [vmem:[#allocation2 + $0x238] sm:$0xff]
    %v580 = vld [vmem:[#allocation2 + $0x240] sm:$0xff]
    %v581 = vld [vmem:[#allocation2 + $0x248] sm:$0xff]
    %v582 = vld [vmem:[#allocation2 + $0x250] sm:$0xff]
    %v583 = vld [vmem:[#allocation2 + $0x258] sm:$0xff]
    %v584 = vld [vmem:[#allocation2 + $0x260] sm:$0xff]
    %v585 = vld [vmem:[#allocation2 + $0x268] sm:$0xff]
    %v586 = vld [vmem:[#allocation2 + $0x270] sm:$0xff]
    %v587 = vld [vmem:[#allocation2 + $0x278] sm:$0xff]
    %v588 = vld [vmem:[#allocation2 + $0x280] sm:$0xff]
    %v589 = vld [vmem:[#allocation2 + $0x288] sm:$0xff]
    %v590 = vld [vmem:[#allocation2 + $0x290] sm:$0xff]
    %v591 = vld [vmem:[#allocation2 + $0x298] sm:$0xff]
    %v592 = vld [vmem:[#allocation2 + $0x2a0] sm:$0xff]
    %v593 = vld [vmem:[#allocation2 + $0x2a8] sm:$0xff]
    %v594 = vld [vmem:[#allocation2 + $0x2b0] sm:$0xff]
    %v595 = vld [vmem:[#allocation2 + $0x2b8] sm:$0xff]
    %v596 = vld [vmem:[#allocation2 + $0x2c0] sm:$0xff]
    %v597 = vld [vmem:[#allocation2 + $0x2c8] sm:$0xff]
    %v598 = vld [vmem:[#allocation2 + $0x2d0] sm:$0xff]
    %v599 = vld [vmem:[#allocation2 + $0x2d8] sm:$0xff]
    %v600 = vld [vmem:[#allocation2 + $0x2e0] sm:$0xff]
    %v601 = vld [vmem:[#allocation2 + $0x2e8] sm:$0xff]
    %v602 = vld [vmem:[#allocation2 + $0x2f0] sm:$0xff]
    %v603 = vld [vmem:[#allocation2 + $0x2f8] sm:$0xff]
    %v604 = vld [vmem:[#allocation2 + $0x300] sm:$0xff]
    %v605 = vld [vmem:[#allocation2 + $0x308] sm:$0xff]
    %v606 = vld [vmem:[#allocation2 + $0x310] sm:$0xff]
    %v607 = vld [vmem:[#allocation2 + $0x318] sm:$0xff]
    %v608 = vld [vmem:[#allocation2 + $0x320] sm:$0xff]
    %v609 = vld [vmem:[#allocation2 + $0x328] sm:$0xff]
    %v610 = vld [vmem:[#allocation2 + $0x330] sm:$0xff]
    %v611 = vld [vmem:[#allocation2 + $0x338] sm:$0xff]
    %v612 = vld [vmem:[#allocation2 + $0x340] sm:$0xff]
    %v613 = vld [vmem:[#allocation2 + $0x348] sm:$0xff]
    %v614 = vld [vmem:[#allocation2 + $0x350] sm:$0xff]
    %v615 = vld [vmem:[#allocation2 + $0x358] sm:$0xff]
    %v616 = vld [vmem:[#allocation2 + $0x360] sm:$0xff]
    %v617 = vld [vmem:[#allocation2 + $0x368] sm:$0xff]
    %v618 = vld [vmem:[#allocation2 + $0x370] sm:$0xff]
    %v619 = vld [vmem:[#allocation2 + $0x378] sm:$0xff]
    %v620 = vld [vmem:[#allocation2 + $0x380] sm:$0xff]
    %v621 = vld [vmem:[#allocation2 + $0x388] sm:$0xff]
    %v622 = vld [vmem:[#allocation2 + $0x390] sm:$0xff]
    %v623 = vld [vmem:[#allocation2 + $0x398] sm:$0xff]
    %v624 = vld [vmem:[#allocation2 + $0x3a0] sm:$0xff]
    %v625 = vld [vmem:[#allocation2 + $0x3a8] sm:$0xff]
    %v626 = vld [vmem:[#allocation2 + $0x3b0] sm:$0xff]
    %v627 = vld [vmem:[#allocation2 + $0x3b8] sm:$0xff]
    %v628 = vld [vmem:[#allocation2 + $0x3c0] sm:$0xff]
    %v629 = vld [vmem:[#allocation2 + $0x3c8] sm:$0xff]
    %v630 = vld [vmem:[#allocation2 + $0x3d0] sm:$0xff]
    %v631 = vld [vmem:[#allocation2 + $0x3d8] sm:$0xff]
    %v632 = vld [vmem:[#allocation2 + $0x3e0] sm:$0xff]
    %v633 = vld [vmem:[#allocation2 + $0x3e8] sm:$0xff]
    %v634 = vld [vmem:[#allocation2 + $0x3f0] sm:$0xff]
    %v635 = vld [vmem:[#allocation2 + $0x3f8] sm:$0xff]
    %v636 = vpack.c.bf16 %v185, %v185
    %v637 = vpack.c.bf16 %v187, %v187
    %v638 = vpack.c.bf16 %v414, %v414
    %v639 = vpack.c.bf16 %v418, %v418
    %v640 = vld [vmem:[%s7 + $0x2] sm:$0xf]
    %v642 = vlaneseq
    %v643 = vshrl.u32 %v642, 7
    %v644 = vsub.s32 0, %v643
    %v645 = vrot.slane %v640, %v644
    %v646 = vlaneseq
    %v647 = vshrl.u32 %v646, 7
    %v648 = vsub.s32 1, %v647
    %v649 = vrot.slane %v640, %v648
    %v650 = vlaneseq
    %v651 = vshrl.u32 %v650, 7
    %v652 = vsub.s32 2, %v651
    %v653 = vrot.slane %v640, %v652
    %v654 = vlaneseq
    %v655 = vshrl.u32 %v654, 7
    %v656 = vsub.s32 3, %v655
    %v657 = vrot.slane %v640, %v656
    %662 = vmatprep.subr.bf16.mxu0 %v509
    %663 = vmatpush1.bf16.msra.mxu0 %v508
    %664 = vmatprep.subr.bf16.mxu0 %v513
    %665 = vmatpush1.bf16.msra.mxu0 %v512
    %666 = vmatprep.subr.bf16.mxu0 %v517
    %667 = vmatpush1.bf16.msra.mxu0 %v516
    %668 = vmatprep.subr.bf16.mxu0 %v521
    %669 = vmatpush1.bf16.msra.mxu0 %v520
    %670 = vmatprep.subr.bf16.mxu0 %v525
    %671 = vmatpush1.bf16.msra.mxu0 %v524
    %672 = vmatprep.subr.bf16.mxu0 %v529
    %673 = vmatpush1.bf16.msra.mxu0 %v528
    %674 = vmatprep.subr.bf16.mxu0 %v533
    %675 = vmatpush1.bf16.msra.mxu0 %v532
    %676 = vmatprep.subr.bf16.mxu0 %v537
    %677 = vmatpush1.bf16.msra.mxu0 %v536
    %678 = vmatprep.subr.bf16.mxu0 %v541
    %679 = vmatpush1.bf16.msra.mxu0 %v540
    %680 = vmatprep.subr.bf16.mxu0 %v545
    %681 = vmatpush1.bf16.msra.mxu0 %v544
    %682 = vmatprep.subr.bf16.mxu0 %v549
    %683 = vmatpush1.bf16.msra.mxu0 %v548
    %684 = vmatprep.subr.bf16.mxu0 %v553
    %685 = vmatpush1.bf16.msra.mxu0 %v552
    %686 = vmatprep.subr.bf16.mxu0 %v557
    %687 = vmatpush1.bf16.msra.mxu0 %v556
    %688 = vmatprep.subr.bf16.mxu0 %v561
    %689 = vmatpush1.bf16.msra.mxu0 %v560
    %690 = vmatprep.subr.bf16.mxu0 %v565
    %691 = vmatpush1.bf16.msra.mxu0 %v564
    %692 = vmatprep.subr.bf16.mxu0 %v569
    %693 = vmatpush1.bf16.msra.mxu0 %v568
    %694 = vmatprep.mubr.bf16.mxu0 %v637
    %695 = vmatmul.mubr.bf16.gmra.mrb[0].mxu0 %v636
    %v696 = vpop.f32.mrb[0].mxu0
    %v697 = vadd.f32 %v645, %v696
    %v698 = vpop.f32.mrb[0].mxu0
    %v699 = vadd.f32 %v649, %v698
    %v700 = vpop.f32.mrb[0].mxu0
    %v701 = vpop.f32.mrb[0].mxu0
    %702 = vdwg.mxu0
    %703 = vmatprep.subr.bf16.mxu0 %v573
    %704 = vmatpush1.bf16.msra.mxu0 %v572
    %705 = vmatprep.subr.bf16.mxu0 %v577
    %706 = vmatpush1.bf16.msra.mxu0 %v576
    %707 = vmatprep.subr.bf16.mxu0 %v581
    %708 = vmatpush1.bf16.msra.mxu0 %v580
    %709 = vmatprep.subr.bf16.mxu0 %v585
    %710 = vmatpush1.bf16.msra.mxu0 %v584
    %711 = vmatprep.subr.bf16.mxu0 %v589
    %712 = vmatpush1.bf16.msra.mxu0 %v588
    %713 = vmatprep.subr.bf16.mxu0 %v593
    %714 = vmatpush1.bf16.msra.mxu0 %v592
    %715 = vmatprep.subr.bf16.mxu0 %v597
    %716 = vmatpush1.bf16.msra.mxu0 %v596
    %717 = vmatprep.subr.bf16.mxu0 %v601
    %718 = vmatpush1.bf16.msra.mxu0 %v600
    %719 = vmatprep.subr.bf16.mxu0 %v605
    %720 = vmatpush1.bf16.msra.mxu0 %v604
    %721 = vmatprep.subr.bf16.mxu0 %v609
    %722 = vmatpush1.bf16.msra.mxu0 %v608
    %723 = vmatprep.subr.bf16.mxu0 %v613
    %724 = vmatpush1.bf16.msra.mxu0 %v612
    %725 = vmatprep.subr.bf16.mxu0 %v617
    %726 = vmatpush1.bf16.msra.mxu0 %v616
    %727 = vmatprep.subr.bf16.mxu0 %v621
    %728 = vmatpush1.bf16.msra.mxu0 %v620
    %729 = vmatprep.subr.bf16.mxu0 %v625
    %730 = vmatpush1.bf16.msra.mxu0 %v624
    %731 = vmatprep.subr.bf16.mxu0 %v629
    %732 = vmatpush1.bf16.msra.mxu0 %v628
    %733 = vmatprep.subr.bf16.mxu0 %v633
    %734 = vmatpush1.bf16.msra.mxu0 %v632
    %735 = vmatprep.mubr.bf16.mxu0 %v639
    %736 = vmatmul.mubr.bf16.gmra.mrb[0].mxu0 %v638
    %v737 = vpop.f32.mrb[0].mxu0
    %v738 = vadd.f32 %v697, %v737
    %v739 = vpop.f32.mrb[0].mxu0
    %v740 = vadd.f32 %v699, %v739
    %v741 = vpop.f32.mrb[0].mxu0
    %v742 = vpop.f32.mrb[0].mxu0
    %743 = vdwg.mxu0
    %744 = vmatprep.subr.bf16.mxu0 %v511
    %745 = vmatpush1.bf16.msra.mxu0 %v510
    %746 = vmatprep.subr.bf16.mxu0 %v515
    %747 = vmatpush1.bf16.msra.mxu0 %v514
    %748 = vmatprep.subr.bf16.mxu0 %v519
    %749 = vmatpush1.bf16.msra.mxu0 %v518
    %750 = vmatprep.subr.bf16.mxu0 %v523
    %751 = vmatpush1.bf16.msra.mxu0 %v522
    %752 = vmatprep.subr.bf16.mxu0 %v527
    %753 = vmatpush1.bf16.msra.mxu0 %v526
    %754 = vmatprep.subr.bf16.mxu0 %v531
    %755 = vmatpush1.bf16.msra.mxu0 %v530
    %756 = vmatprep.subr.bf16.mxu0 %v535
    %757 = vmatpush1.bf16.msra.mxu0 %v534
    %758 = vmatprep.subr.bf16.mxu0 %v539
    %759 = vmatpush1.bf16.msra.mxu0 %v538
    %760 = vmatprep.subr.bf16.mxu0 %v543
    %761 = vmatpush1.bf16.msra.mxu0 %v542
    %762 = vmatprep.subr.bf16.mxu0 %v547
    %763 = vmatpush1.bf16.msra.mxu0 %v546
    %764 = vmatprep.subr.bf16.mxu0 %v551
    %765 = vmatpush1.bf16.msra.mxu0 %v550
    %766 = vmatprep.subr.bf16.mxu0 %v555
    %767 = vmatpush1.bf16.msra.mxu0 %v554
    %768 = vmatprep.subr.bf16.mxu0 %v559
    %769 = vmatpush1.bf16.msra.mxu0 %v558
    %770 = vmatprep.subr.bf16.mxu0 %v563
    %771 = vmatpush1.bf16.msra.mxu0 %v562
    %772 = vmatprep.subr.bf16.mxu0 %v567
    %773 = vmatpush1.bf16.msra.mxu0 %v566
    %774 = vmatprep.subr.bf16.mxu0 %v571
    %775 = vmatpush1.bf16.msra.mxu0 %v570
    %776 = vmatprep.mubr.bf16.mxu0 %v637
    %777 = vmatmul.mubr.bf16.gmra.mrb[0].mxu0 %v636
    %v778 = vpop.f32.mrb[0].mxu0
    %v779 = vadd.f32 %v653, %v778
    %v780 = vpop.f32.mrb[0].mxu0
    %v781 = vadd.f32 %v657, %v780
    %v782 = vpop.f32.mrb[0].mxu0
    %v783 = vpop.f32.mrb[0].mxu0
    %784 = vdwg.mxu0
    %785 = vmatprep.subr.bf16.mxu0 %v575
    %786 = vmatpush1.bf16.msra.mxu0 %v574
    %787 = vmatprep.subr.bf16.mxu0 %v579
    %788 = vmatpush1.bf16.msra.mxu0 %v578
    %789 = vmatprep.subr.bf16.mxu0 %v583
    %790 = vmatpush1.bf16.msra.mxu0 %v582
    %791 = vmatprep.subr.bf16.mxu0 %v587
    %792 = vmatpush1.bf16.msra.mxu0 %v586
    %793 = vmatprep.subr.bf16.mxu0 %v591
    %794 = vmatpush1.bf16.msra.mxu0 %v590
    %795 = vmatprep.subr.bf16.mxu0 %v595
    %796 = vmatpush1.bf16.msra.mxu0 %v594
    %797 = vmatprep.subr.bf16.mxu0 %v599
    %798 = vmatpush1.bf16.msra.mxu0 %v598
    %799 = vmatprep.subr.bf16.mxu0 %v603
    %800 = vmatpush1.bf16.msra.mxu0 %v602
    %801 = vmatprep.subr.bf16.mxu0 %v607
    %802 = vmatpush1.bf16.msra.mxu0 %v606
    %803 = vmatprep.subr.bf16.mxu0 %v611
    %804 = vmatpush1.bf16.msra.mxu0 %v610
    %805 = vmatprep.subr.bf16.mxu0 %v615
    %806 = vmatpush1.bf16.msra.mxu0 %v614
    %807 = vmatprep.subr.bf16.mxu0 %v619
    %808 = vmatpush1.bf16.msra.mxu0 %v618
    %809 = vmatprep.subr.bf16.mxu0 %v623
    %810 = vmatpush1.bf16.msra.mxu0 %v622
    %811 = vmatprep.subr.bf16.mxu0 %v627
    %812 = vmatpush1.bf16.msra.mxu0 %v626
    %813 = vmatprep.subr.bf16.mxu0 %v631
    %814 = vmatpush1.bf16.msra.mxu0 %v630
    %815 = vmatprep.subr.bf16.mxu0 %v635
    %816 = vmatpush1.bf16.msra.mxu0 %v634
    %817 = vmatprep.mubr.bf16.mxu0 %v639
    %818 = vmatmul.mubr.bf16.gmra.mrb[0].mxu0 %v638
    %v819 = vpop.f32.mrb[0].mxu0
    %v820 = vadd.f32 %v779, %v819
    %v821 = vpop.f32.mrb[0].mxu0
    %v822 = vadd.f32 %v781, %v821
    %v823 = vpop.f32.mrb[0].mxu0
    %v824 = vpop.f32.mrb[0].mxu0
    %825 = vdwg.mxu0
    %v826 = vxor.u32 %v738, 2147483648
    %v827 = vxor.u32 %v740, 2147483648
    %v828 = vxor.u32 %v820, 2147483648
    %v829 = vxor.u32 %v822, 2147483648
    %v830 = vmul.f32 %v826, 1.442695
    %v831 = vpow.pop %v830
    %v832 = vmul.f32 %v827, 1.442695
    %v833 = vpow.pop %v832
    %v834 = vmul.f32 %v828, 1.442695
    %v835 = vpow.pop %v834
    %v836 = vmul.f32 %v829, 1.442695
    %v837 = vpow.pop %v836
    %v838 = vadd.f32 %v831, 1.0
    %v839 = vadd.f32 %v833, 1.0
    %v840 = vadd.f32 %v835, 1.0
    %v841 = vadd.f32 %v837, 1.0
    %v842 = vrcp.pop %v838
    %v843 = vmul.f32 1.0, %v842
    %v844 = vrcp.pop %v839
    %v845 = vmul.f32 1.0, %v844
    %v846 = vrcp.pop %v840
    %v847 = vmul.f32 1.0, %v846
    %v848 = vrcp.pop %v841
    %v849 = vmul.f32 1.0, %v848
    %v850 = vld [vmem:[#allocation4] sm:$0xf]
    %v851 = vld [vmem:[#allocation4 + $0x4] sm:$0xf]
    %v852 = vld [vmem:[#allocation4 + $0x8] sm:$0xf]
    %v853 = vld [vmem:[#allocation4 + $0xc] sm:$0xf]
    %v854 = vld [vmem:[#allocation4 + $0x10] sm:$0xf]
    %v855 = vld [vmem:[#allocation4 + $0x14] sm:$0xf]
    %v856 = vld [vmem:[#allocation4 + $0x18] sm:$0xf]
    %v857 = vld [vmem:[#allocation4 + $0x1c] sm:$0xf]
    %v858 = vld [vmem:[#allocation4 + $0x20] sm:$0xf]
    %v859 = vld [vmem:[#allocation4 + $0x24] sm:$0xf]
    %v860 = vld [vmem:[#allocation4 + $0x28] sm:$0xf]
    %v861 = vld [vmem:[#allocation4 + $0x2c] sm:$0xf]
    %v862 = vld [vmem:[#allocation4 + $0x30] sm:$0xf]
    %v863 = vld [vmem:[#allocation4 + $0x34] sm:$0xf]
    %v864 = vld [vmem:[#allocation4 + $0x38] sm:$0xf]
    %v865 = vld [vmem:[#allocation4 + $0x3c] sm:$0xf]
    %v866 = vld [vmem:[#allocation4 + $0x40] sm:$0xf]
    %v867 = vld [vmem:[#allocation4 + $0x44] sm:$0xf]
    %v868 = vld [vmem:[#allocation4 + $0x48] sm:$0xf]
    %v869 = vld [vmem:[#allocation4 + $0x4c] sm:$0xf]
    %v870 = vld [vmem:[#allocation4 + $0x50] sm:$0xf]
    %v871 = vld [vmem:[#allocation4 + $0x54] sm:$0xf]
    %v872 = vld [vmem:[#allocation4 + $0x58] sm:$0xf]
    %v873 = vld [vmem:[#allocation4 + $0x5c] sm:$0xf]
    %v874 = vld [vmem:[#allocation4 + $0x60] sm:$0xf]
    %v875 = vld [vmem:[#allocation4 + $0x64] sm:$0xf]
    %v876 = vld [vmem:[#allocation4 + $0x68] sm:$0xf]
    %v877 = vld [vmem:[#allocation4 + $0x6c] sm:$0xf]
    %v878 = vld [vmem:[#allocation4 + $0x70] sm:$0xf]
    %v879 = vld [vmem:[#allocation4 + $0x74] sm:$0xf]
    %v880 = vld [vmem:[#allocation4 + $0x78] sm:$0xf]
    %v881 = vld [vmem:[#allocation4 + $0x7c] sm:$0xf]
    %v882 = vld [vmem:[#allocation4 + $0x80] sm:$0xf]
    %v883 = vld [vmem:[#allocation4 + $0x84] sm:$0xf]
    %v884 = vld [vmem:[#allocation4 + $0x88] sm:$0xf]
    %v885 = vld [vmem:[#allocation4 + $0x8c] sm:$0xf]
    %v886 = vld [vmem:[#allocation4 + $0x90] sm:$0xf]
    %v887 = vld [vmem:[#allocation4 + $0x94] sm:$0xf]
    %v888 = vld [vmem:[#allocation4 + $0x98] sm:$0xf]
    %v889 = vld [vmem:[#allocation4 + $0x9c] sm:$0xf]
    %v890 = vld [vmem:[#allocation4 + $0xa0] sm:$0xf]
    %v891 = vld [vmem:[#allocation4 + $0xa4] sm:$0xf]
    %v892 = vld [vmem:[#allocation4 + $0xa8] sm:$0xf]
    %v893 = vld [vmem:[#allocation4 + $0xac] sm:$0xf]
    %v894 = vld [vmem:[#allocation4 + $0xb0] sm:$0xf]
    %v895 = vld [vmem:[#allocation4 + $0xb4] sm:$0xf]
    %v896 = vld [vmem:[#allocation4 + $0xb8] sm:$0xf]
    %v897 = vld [vmem:[#allocation4 + $0xbc] sm:$0xf]
    %v898 = vld [vmem:[#allocation4 + $0xc0] sm:$0xf]
    %v899 = vld [vmem:[#allocation4 + $0xc4] sm:$0xf]
    %v900 = vld [vmem:[#allocation4 + $0xc8] sm:$0xf]
    %v901 = vld [vmem:[#allocation4 + $0xcc] sm:$0xf]
    %v902 = vld [vmem:[#allocation4 + $0xd0] sm:$0xf]
    %v903 = vld [vmem:[#allocation4 + $0xd4] sm:$0xf]
    %v904 = vld [vmem:[#allocation4 + $0xd8] sm:$0xf]
    %v905 = vld [vmem:[#allocation4 + $0xdc] sm:$0xf]
    %v906 = vld [vmem:[#allocation4 + $0xe0] sm:$0xf]
    %v907 = vld [vmem:[#allocation4 + $0xe4] sm:$0xf]
    %v908 = vld [vmem:[#allocation4 + $0xe8] sm:$0xf]
    %v909 = vld [vmem:[#allocation4 + $0xec] sm:$0xf]
    %v910 = vld [vmem:[#allocation4 + $0xf0] sm:$0xf]
    %v911 = vld [vmem:[#allocation4 + $0xf4] sm:$0xf]
    %v912 = vld [vmem:[#allocation4 + $0xf8] sm:$0xf]
    %v913 = vld [vmem:[#allocation4 + $0xfc] sm:$0xf]
    %v914 = vpack.c.bf16 %v843, %v843
    %v915 = vpack.c.bf16 %v845, %v845
    %v916 = vpack.c.bf16 %v847, %v847
    %v917 = vpack.c.bf16 %v849, %v849
    %v918 = vld [vmem:[%s7 + $0x6] sm:$0x1]
    %v983 = vunpack.c.l.b16 %v850
    %v984 = vunpack.c.l.b16 %v851
    %v985 = vunpack.c.l.b16 %v852
    %v986 = vunpack.c.l.b16 %v853
    %v987 = vunpack.c.l.b16 %v854
    %v988 = vunpack.c.l.b16 %v855
    %v989 = vunpack.c.l.b16 %v856
    %v990 = vunpack.c.l.b16 %v857
    %v991 = vunpack.c.l.b16 %v858
    %v992 = vunpack.c.l.b16 %v859
    %v993 = vunpack.c.l.b16 %v860
    %v994 = vunpack.c.l.b16 %v861
    %v995 = vunpack.c.l.b16 %v862
    %v996 = vunpack.c.l.b16 %v863
    %v997 = vunpack.c.l.b16 %v864
    %v998 = vunpack.c.l.b16 %v865
    %v999 = vunpack.c.l.b16 %v866
    %v1000 = vunpack.c.l.b16 %v867
    %v1001 = vunpack.c.l.b16 %v868
    %v1002 = vunpack.c.l.b16 %v869
    %v1003 = vunpack.c.l.b16 %v870
    %v1004 = vunpack.c.l.b16 %v871
    %v1005 = vunpack.c.l.b16 %v872
    %v1006 = vunpack.c.l.b16 %v873
    %v1007 = vunpack.c.l.b16 %v874
    %v1008 = vunpack.c.l.b16 %v875
    %v1009 = vunpack.c.l.b16 %v876
    %v1010 = vunpack.c.l.b16 %v877
    %v1011 = vunpack.c.l.b16 %v878
    %v1012 = vunpack.c.l.b16 %v879
    %v1013 = vunpack.c.l.b16 %v880
    %v1014 = vunpack.c.l.b16 %v881
    %v1015 = vunpack.c.l.b16 %v882
    %v1016 = vunpack.c.l.b16 %v883
    %v1017 = vunpack.c.l.b16 %v884
    %v1018 = vunpack.c.l.b16 %v885
    %v1019 = vunpack.c.l.b16 %v886
    %v1020 = vunpack.c.l.b16 %v887
    %v1021 = vunpack.c.l.b16 %v888
    %v1022 = vunpack.c.l.b16 %v889
    %v1023 = vunpack.c.l.b16 %v890
    %v1024 = vunpack.c.l.b16 %v891
    %v1025 = vunpack.c.l.b16 %v892
    %v1026 = vunpack.c.l.b16 %v893
    %v1027 = vunpack.c.l.b16 %v894
    %v1028 = vunpack.c.l.b16 %v895
    %v1029 = vunpack.c.l.b16 %v896
    %v1030 = vunpack.c.l.b16 %v897
    %v1031 = vunpack.c.l.b16 %v898
    %v1032 = vunpack.c.l.b16 %v899
    %v1033 = vunpack.c.l.b16 %v900
    %v1034 = vunpack.c.l.b16 %v901
    %v1035 = vunpack.c.l.b16 %v902
    %v1036 = vunpack.c.l.b16 %v903
    %v1037 = vunpack.c.l.b16 %v904
    %v1038 = vunpack.c.l.b16 %v905
    %v1039 = vunpack.c.l.b16 %v906
    %v1040 = vunpack.c.l.b16 %v907
    %v1041 = vunpack.c.l.b16 %v908
    %v1042 = vunpack.c.l.b16 %v909
    %v1043 = vunpack.c.l.b16 %v910
    %v1044 = vunpack.c.l.b16 %v911
    %v1045 = vunpack.c.l.b16 %v912
    %v1046 = vunpack.c.l.b16 %v913
    %v1047 = vpack.c.b16 %v984, %v983
    %v1048 = vpack.c.b16 %v986, %v985
    %v1049 = vpack.c.b16 %v988, %v987
    %v1050 = vpack.c.b16 %v990, %v989
    %v1051 = vpack.c.b16 %v992, %v991
    %v1052 = vpack.c.b16 %v994, %v993
    %v1053 = vpack.c.b16 %v996, %v995
    %v1054 = vpack.c.b16 %v998, %v997
    %v1055 = vpack.c.b16 %v1000, %v999
    %v1056 = vpack.c.b16 %v1002, %v1001
    %v1057 = vpack.c.b16 %v1004, %v1003
    %v1058 = vpack.c.b16 %v1006, %v1005
    %v1059 = vpack.c.b16 %v1008, %v1007
    %v1060 = vpack.c.b16 %v1010, %v1009
    %v1061 = vpack.c.b16 %v1012, %v1011
    %v1062 = vpack.c.b16 %v1014, %v1013
    %v1063 = vpack.c.b16 %v1016, %v1015
    %v1064 = vpack.c.b16 %v1018, %v1017
    %v1065 = vpack.c.b16 %v1020, %v1019
    %v1066 = vpack.c.b16 %v1022, %v1021
    %v1067 = vpack.c.b16 %v1024, %v1023
    %v1068 = vpack.c.b16 %v1026, %v1025
    %v1069 = vpack.c.b16 %v1028, %v1027
    %v1070 = vpack.c.b16 %v1030, %v1029
    %v1071 = vpack.c.b16 %v1032, %v1031
    %v1072 = vpack.c.b16 %v1034, %v1033
    %v1073 = vpack.c.b16 %v1036, %v1035
    %v1074 = vpack.c.b16 %v1038, %v1037
    %v1075 = vpack.c.b16 %v1040, %v1039
    %v1076 = vpack.c.b16 %v1042, %v1041
    %v1077 = vpack.c.b16 %v1044, %v1043
    %v1078 = vpack.c.b16 %v1046, %v1045
    %1111 = vmatprep.subr.bf16.mxu0 0
    %1112 = vmatpush1.bf16.msra.mxu0 %v1047
    %1113 = vmatprep.subr.bf16.mxu0 0
    %1114 = vmatpush1.bf16.msra.mxu0 %v1048
    %1115 = vmatprep.subr.bf16.mxu0 0
    %1116 = vmatpush1.bf16.msra.mxu0 %v1049
    %1117 = vmatprep.subr.bf16.mxu0 0
    %1118 = vmatpush1.bf16.msra.mxu0 %v1050
    %1119 = vmatprep.subr.bf16.mxu0 0
    %1120 = vmatpush1.bf16.msra.mxu0 %v1051
    %1121 = vmatprep.subr.bf16.mxu0 0
    %1122 = vmatpush1.bf16.msra.mxu0 %v1052
    %1123 = vmatprep.subr.bf16.mxu0 0
    %1124 = vmatpush1.bf16.msra.mxu0 %v1053
    %1125 = vmatprep.subr.bf16.mxu0 0
    %1126 = vmatpush1.bf16.msra.mxu0 %v1054
    %1127 = vmatprep.subr.bf16.mxu0 0
    %1128 = vmatpush1.bf16.msra.mxu0 %v1055
    %1129 = vmatprep.subr.bf16.mxu0 0
    %1130 = vmatpush1.bf16.msra.mxu0 %v1056
    %1131 = vmatprep.subr.bf16.mxu0 0
    %1132 = vmatpush1.bf16.msra.mxu0 %v1057
    %1133 = vmatprep.subr.bf16.mxu0 0
    %1134 = vmatpush1.bf16.msra.mxu0 %v1058
    %1135 = vmatprep.subr.bf16.mxu0 0
    %1136 = vmatpush1.bf16.msra.mxu0 %v1059
    %1137 = vmatprep.subr.bf16.mxu0 0
    %1138 = vmatpush1.bf16.msra.mxu0 %v1060
    %1139 = vmatprep.subr.bf16.mxu0 0
    %1140 = vmatpush1.bf16.msra.mxu0 %v1061
    %1141 = vmatprep.subr.bf16.mxu0 0
    %1142 = vmatpush1.bf16.msra.mxu0 %v1062
    %1143 = vmatprep.mubr.bf16.mxu0 %v915
    %1144 = vmatmul.mubr.bf16.gmra.mrb[0].mxu0 %v914
    %v1145 = vpop.f32.mrb[0].mxu0
    %v1146 = vadd.f32 %v918, %v1145
    %v1147 = vpop.f32.mrb[0].mxu0
    %v1148 = vpop.f32.mrb[0].mxu0
    %v1149 = vpop.f32.mrb[0].mxu0
    %1150 = vdwg.mxu0
    %1151 = vmatprep.subr.bf16.mxu0 0
    %1152 = vmatpush1.bf16.msra.mxu0 %v1063
    %1153 = vmatprep.subr.bf16.mxu0 0
    %1154 = vmatpush1.bf16.msra.mxu0 %v1064
    %1155 = vmatprep.subr.bf16.mxu0 0
    %1156 = vmatpush1.bf16.msra.mxu0 %v1065
    %1157 = vmatprep.subr.bf16.mxu0 0
    %1158 = vmatpush1.bf16.msra.mxu0 %v1066
    %1159 = vmatprep.subr.bf16.mxu0 0
    %1160 = vmatpush1.bf16.msra.mxu0 %v1067
    %1161 = vmatprep.subr.bf16.mxu0 0
    %1162 = vmatpush1.bf16.msra.mxu0 %v1068
    %1163 = vmatprep.subr.bf16.mxu0 0
    %1164 = vmatpush1.bf16.msra.mxu0 %v1069
    %1165 = vmatprep.subr.bf16.mxu0 0
    %1166 = vmatpush1.bf16.msra.mxu0 %v1070
    %1167 = vmatprep.subr.bf16.mxu0 0
    %1168 = vmatpush1.bf16.msra.mxu0 %v1071
    %1169 = vmatprep.subr.bf16.mxu0 0
    %1170 = vmatpush1.bf16.msra.mxu0 %v1072
    %1171 = vmatprep.subr.bf16.mxu0 0
    %1172 = vmatpush1.bf16.msra.mxu0 %v1073
    %1173 = vmatprep.subr.bf16.mxu0 0
    %1174 = vmatpush1.bf16.msra.mxu0 %v1074
    %1175 = vmatprep.subr.bf16.mxu0 0
    %1176 = vmatpush1.bf16.msra.mxu0 %v1075
    %1177 = vmatprep.subr.bf16.mxu0 0
    %1178 = vmatpush1.bf16.msra.mxu0 %v1076
    %1179 = vmatprep.subr.bf16.mxu0 0
    %1180 = vmatpush1.bf16.msra.mxu0 %v1077
    %1181 = vmatprep.subr.bf16.mxu0 0
    %1182 = vmatpush1.bf16.msra.mxu0 %v1078
    %1183 = vmatprep.mubr.bf16.mxu0 %v917
    %1184 = vmatmul.mubr.bf16.gmra.mrb[0].mxu0 %v916
    %v1185 = vpop.f32.mrb[0].mxu0
    %v1186 = vadd.f32 %v1146, %v1185
    %v1187 = vpop.f32.mrb[0].mxu0
    %v1188 = vpop.f32.mrb[0].mxu0
    %v1189 = vpop.f32.mrb[0].mxu0
    %1190 = vdwg.mxu0
    %v1191 = vxor.u32 %v1186, 2147483648
    %v1192 = vmul.f32 %v1191, 1.442695
    %v1193 = vpow.pop %v1192
    %v1194 = vadd.f32 %v1193, 1.0
    %v1195 = vrcp.pop %v1194
    %v1196 = vmul.f32 1.0, %v1195
    %v1197 = vld [vmem:[#allocation7] sm:$0xf]
    %v1198 = vld [vmem:[#allocation7 + $0x14] sm:$0xf]
    %v1199 = vld [vmem:[#allocation7 + $0x28] sm:$0xf]
    %v1200 = vld [vmem:[#allocation7 + $0x3c] sm:$0xf]
    %v1201 = vld [vmem:[#allocation7 + $0x50] sm:$0xf]
    %v1202 = vld [vmem:[#allocation7 + $0x64] sm:$0xf]
    %v1203 = vld [vmem:[#allocation7 + $0x78] sm:$0xf]
    %v1204 = vld [vmem:[#allocation7 + $0x8c] sm:$0xf]
    %v1205 = vld [vmem:[#allocation7 + $0xa0] sm:$0xf]
    %v1206 = vld [vmem:[#allocation7 + $0xb4] sm:$0xf]
    %v1207 = vld [vmem:[#allocation7 + $0xc8] sm:$0xf]
    %v1208 = vld [vmem:[#allocation7 + $0xdc] sm:$0xf]
    %v1209 = vld [vmem:[#allocation7 + $0xf0] sm:$0xf]
    %v1210 = vld [vmem:[#allocation7 + $0x104] sm:$0xf]
    %v1211 = vld [vmem:[#allocation7 + $0x118] sm:$0xf]
    %v1212 = vld [vmem:[#allocation7 + $0x12c] sm:$0xf]
    %v1213 = vpack.c.bf16 %v1196, %v1196
    %v1214 = vld [vmem:[%s7 + $0x7] sm:$0x1]
    %v1231 = vunpack.c.l.b16 %v1197
    %v1232 = vunpack.c.l.b16 %v1198
    %v1233 = vunpack.c.l.b16 %v1199
    %v1234 = vunpack.c.l.b16 %v1200
    %v1235 = vunpack.c.l.b16 %v1201
    %v1236 = vunpack.c.l.b16 %v1202
    %v1237 = vunpack.c.l.b16 %v1203
    %v1238 = vunpack.c.l.b16 %v1204
    %v1239 = vunpack.c.l.b16 %v1205
    %v1240 = vunpack.c.l.b16 %v1206
    %v1241 = vunpack.c.l.b16 %v1207
    %v1242 = vunpack.c.l.b16 %v1208
    %v1243 = vunpack.c.l.b16 %v1209
    %v1244 = vunpack.c.l.b16 %v1210
    %v1245 = vunpack.c.l.b16 %v1211
    %v1246 = vunpack.c.l.b16 %v1212
    %v1247 = vpack.c.b16 %v1232, %v1231
    %v1248 = vpack.c.b16 %v1234, %v1233
    %v1249 = vpack.c.b16 %v1236, %v1235
    %v1250 = vpack.c.b16 %v1238, %v1237
    %v1251 = vpack.c.b16 %v1240, %v1239
    %v1252 = vpack.c.b16 %v1242, %v1241
    %v1253 = vpack.c.b16 %v1244, %v1243
    %v1254 = vpack.c.b16 %v1246, %v1245
    %1263 = vmatprep.subr.bf16.mxu0 0
    %1264 = vmatpush1.bf16.msra.mxu0 %v1247
    %1265 = vmatprep.subr.bf16.mxu0 0
    %1266 = vmatpush1.bf16.msra.mxu0 %v1248
    %1267 = vmatprep.subr.bf16.mxu0 0
    %1268 = vmatpush1.bf16.msra.mxu0 %v1249
    %1269 = vmatprep.subr.bf16.mxu0 0
    %1270 = vmatpush1.bf16.msra.mxu0 %v1250
    %1271 = vmatprep.subr.bf16.mxu0 0
    %1272 = vmatpush1.bf16.msra.mxu0 %v1251
    %1273 = vmatprep.subr.bf16.mxu0 0
    %1274 = vmatpush1.bf16.msra.mxu0 %v1252
    %1275 = vmatprep.subr.bf16.mxu0 0
    %1276 = vmatpush1.bf16.msra.mxu0 %v1253
    %1277 = vmatprep.subr.bf16.mxu0 0
    %1278 = vmatpush1.bf16.msra.mxu0 %v1254
    %1279 = vmatprep.subr.bf16.mxu0 0
    %1280 = vmatpush1.bf16.msra.mxu0 0
    %1281 = vmatprep.subr.bf16.mxu0 0
    %1282 = vmatpush1.bf16.msra.mxu0 0
    %1283 = vmatprep.subr.bf16.mxu0 0
    %1284 = vmatpush1.bf16.msra.mxu0 0
    %1285 = vmatprep.subr.bf16.mxu0 0
    %1286 = vmatpush1.bf16.msra.mxu0 0
    %1287 = vmatprep.subr.bf16.mxu0 0
    %1288 = vmatpush1.bf16.msra.mxu0 0
    %1289 = vmatprep.subr.bf16.mxu0 0
    %1290 = vmatpush1.bf16.msra.mxu0 0
    %1291 = vmatprep.subr.bf16.mxu0 0
    %1292 = vmatpush1.bf16.msra.mxu0 0
    %1293 = vmatprep.subr.bf16.mxu0 0
    %1294 = vmatpush1.bf16.msra.mxu0 0
    %1295 = vmatprep.mubr.bf16.mxu0 0
    %1296 = vmatmul.mubr.bf16.gmra.mrb[0].mxu0 %v1213
    %v1297 = vpop.f32.mrb[0].mxu0
    %v1298 = vadd.f32 %v1214, %v1297
    %v1299 = vpop.f32.mrb[0].mxu0
    %v1300 = vpop.f32.mrb[0].mxu0
    %v1301 = vpop.f32.mrb[0].mxu0
    %1302 = vdwg.mxu0
    %v1303 = vld [vmem:[#allocation7 + $0x8] sm:$0xf]
    %v1304 = vld [vmem:[#allocation7 + $0x1c] sm:$0xf]
    %v1305 = vld [vmem:[#allocation7 + $0x30] sm:$0xf]
    %v1306 = vld [vmem:[#allocation7 + $0x44] sm:$0xf]
    %v1307 = vld [vmem:[#allocation7 + $0x58] sm:$0xf]
    %v1308 = vld [vmem:[#allocation7 + $0x6c] sm:$0xf]
    %v1309 = vld [vmem:[#allocation7 + $0x80] sm:$0xf]
    %v1310 = vld [vmem:[#allocation7 + $0x94] sm:$0xf]
    %v1311 = vld [vmem:[#allocation7 + $0xa8] sm:$0xf]
    %v1312 = vld [vmem:[#allocation7 + $0xbc] sm:$0xf]
    %v1313 = vld [vmem:[#allocation7 + $0xd0] sm:$0xf]
    %v1314 = vld [vmem:[#allocation7 + $0xe4] sm:$0xf]
    %v1315 = vld [vmem:[#allocation7 + $0xf8] sm:$0xf]
    %v1316 = vld [vmem:[#allocation7 + $0x10c] sm:$0xf]
    %v1317 = vld [vmem:[#allocation7 + $0x120] sm:$0xf]
    %v1318 = vld [vmem:[#allocation7 + $0x134] sm:$0xf]
    %v1319 = vpack.c.bf16 %v1298, %v1298
    %v1320 = vld [vmem:[#allocation7 + $0xc] sm:$0xf]
    %v1321 = vld [vmem:[#allocation7 + $0x20] sm:$0xf]
    %v1322 = vld [vmem:[#allocation7 + $0x34] sm:$0xf]
    %v1323 = vld [vmem:[#allocation7 + $0x48] sm:$0xf]
    %v1324 = vld [vmem:[#allocation7 + $0x5c] sm:$0xf]
    %v1325 = vld [vmem:[#allocation7 + $0x70] sm:$0xf]
    %v1326 = vld [vmem:[#allocation7 + $0x84] sm:$0xf]
    %v1327 = vld [vmem:[#allocation7 + $0x98] sm:$0xf]
    %v1328 = vld [vmem:[#allocation7 + $0xac] sm:$0xf]
    %v1329 = vld [vmem:[#allocation7 + $0xc0] sm:$0xf]
    %v1330 = vld [vmem:[#allocation7 + $0xd4] sm:$0xf]
    %v1331 = vld [vmem:[#allocation7 + $0xe8] sm:$0xf]
    %v1332 = vld [vmem:[#allocation7 + $0xfc] sm:$0xf]
    %v1333 = vld [vmem:[#allocation7 + $0x110] sm:$0xf]
    %v1334 = vld [vmem:[#allocation7 + $0x124] sm:$0xf]
    %v1335 = vld [vmem:[#allocation7 + $0x138] sm:$0xf]
    %v1336 = vpack.c.bf16 %v503, %v503
    %v1353 = vunpack.c.l.b16 %v1320
    %v1354 = vunpack.c.l.b16 %v1321
    %v1355 = vunpack.c.l.b16 %v1322
    %v1356 = vunpack.c.l.b16 %v1323
    %v1357 = vunpack.c.l.b16 %v1324
    %v1358 = vunpack.c.l.b16 %v1325
    %v1359 = vunpack.c.l.b16 %v1326
    %v1360 = vunpack.c.l.b16 %v1327
    %v1361 = vunpack.c.l.b16 %v1328
    %v1362 = vunpack.c.l.b16 %v1329
    %v1363 = vunpack.c.l.b16 %v1330
    %v1364 = vunpack.c.l.b16 %v1331
    %v1365 = vunpack.c.l.b16 %v1332
    %v1366 = vunpack.c.l.b16 %v1333
    %v1367 = vunpack.c.l.b16 %v1334
    %v1368 = vunpack.c.l.b16 %v1335
    %v1369 = vpack.c.b16 %v1354, %v1353
    %v1370 = vpack.c.b16 %v1356, %v1355
    %v1371 = vpack.c.b16 %v1358, %v1357
    %v1372 = vpack.c.b16 %v1360, %v1359
    %v1373 = vpack.c.b16 %v1362, %v1361
    %v1374 = vpack.c.b16 %v1364, %v1363
    %v1375 = vpack.c.b16 %v1366, %v1365
    %v1376 = vpack.c.b16 %v1368, %v1367
    %1385 = vmatprep.subr.bf16.mxu0 0
    %1386 = vmatpush1.bf16.msra.mxu0 %v1369
    %1387 = vmatprep.subr.bf16.mxu0 0
    %1388 = vmatpush1.bf16.msra.mxu0 %v1370
    %1389 = vmatprep.subr.bf16.mxu0 0
    %1390 = vmatpush1.bf16.msra.mxu0 %v1371
    %1391 = vmatprep.subr.bf16.mxu0 0
    %1392 = vmatpush1.bf16.msra.mxu0 %v1372
    %1393 = vmatprep.subr.bf16.mxu0 0
    %1394 = vmatpush1.bf16.msra.mxu0 %v1373
    %1395 = vmatprep.subr.bf16.mxu0 0
    %1396 = vmatpush1.bf16.msra.mxu0 %v1374
    %1397 = vmatprep.subr.bf16.mxu0 0
    %1398 = vmatpush1.bf16.msra.mxu0 %v1375
    %1399 = vmatprep.subr.bf16.mxu0 0
    %1400 = vmatpush1.bf16.msra.mxu0 %v1376
    %1401 = vmatprep.subr.bf16.mxu0 0
    %1402 = vmatpush1.bf16.msra.mxu0 0
    %1403 = vmatprep.subr.bf16.mxu0 0
    %1404 = vmatpush1.bf16.msra.mxu0 0
    %1405 = vmatprep.subr.bf16.mxu0 0
    %1406 = vmatpush1.bf16.msra.mxu0 0
    %1407 = vmatprep.subr.bf16.mxu0 0
    %1408 = vmatpush1.bf16.msra.mxu0 0
    %1409 = vmatprep.subr.bf16.mxu0 0
    %1410 = vmatpush1.bf16.msra.mxu0 0
    %1411 = vmatprep.subr.bf16.mxu0 0
    %1412 = vmatpush1.bf16.msra.mxu0 0
    %1413 = vmatprep.subr.bf16.mxu0 0
    %1414 = vmatpush1.bf16.msra.mxu0 0
    %1415 = vmatprep.subr.bf16.mxu0 0
    %1416 = vmatpush1.bf16.msra.mxu0 0
    %1417 = vmatprep.mubr.bf16.mxu0 0
    %1418 = vmatmul.mubr.bf16.gmra.mrb[0].mxu0 %v1336
    %v1419 = vpop.f32.mrb[0].mxu0
    %v1420 = vadd.f32 0.0, %v1419
    %v1421 = vpop.f32.mrb[0].mxu0
    %v1422 = vpop.f32.mrb[0].mxu0
    %v1423 = vpop.f32.mrb[0].mxu0
    %1424 = vdwg.mxu0
    %v1441 = vunpack.c.l.b16 %v1303
    %v1442 = vunpack.c.l.b16 %v1304
    %v1443 = vunpack.c.l.b16 %v1305
    %v1444 = vunpack.c.l.b16 %v1306
    %v1445 = vunpack.c.l.b16 %v1307
    %v1446 = vunpack.c.l.b16 %v1308
    %v1447 = vunpack.c.l.b16 %v1309
    %v1448 = vunpack.c.l.b16 %v1310
    %v1449 = vunpack.c.l.b16 %v1311
    %v1450 = vunpack.c.l.b16 %v1312
    %v1451 = vunpack.c.l.b16 %v1313
    %v1452 = vunpack.c.l.b16 %v1314
    %v1453 = vunpack.c.l.b16 %v1315
    %v1454 = vunpack.c.l.b16 %v1316
    %v1455 = vunpack.c.l.b16 %v1317
    %v1456 = vunpack.c.l.b16 %v1318
    %v1457 = vpack.c.b16 %v1442, %v1441
    %v1458 = vpack.c.b16 %v1444, %v1443
    %v1459 = vpack.c.b16 %v1446, %v1445
    %v1460 = vpack.c.b16 %v1448, %v1447
    %v1461 = vpack.c.b16 %v1450, %v1449
    %v1462 = vpack.c.b16 %v1452, %v1451
    %v1463 = vpack.c.b16 %v1454, %v1453
    %v1464 = vpack.c.b16 %v1456, %v1455
    %1473 = vmatprep.subr.bf16.mxu0 0
    %1474 = vmatpush1.bf16.msra.mxu0 %v1457
    %1475 = vmatprep.subr.bf16.mxu0 0
    %1476 = vmatpush1.bf16.msra.mxu0 %v1458
    %1477 = vmatprep.subr.bf16.mxu0 0
    %1478 = vmatpush1.bf16.msra.mxu0 %v1459
    %1479 = vmatprep.subr.bf16.mxu0 0
    %1480 = vmatpush1.bf16.msra.mxu0 %v1460
    %1481 = vmatprep.subr.bf16.mxu0 0
    %1482 = vmatpush1.bf16.msra.mxu0 %v1461
    %1483 = vmatprep.subr.bf16.mxu0 0
    %1484 = vmatpush1.bf16.msra.mxu0 %v1462
    %1485 = vmatprep.subr.bf16.mxu0 0
    %1486 = vmatpush1.bf16.msra.mxu0 %v1463
    %1487 = vmatprep.subr.bf16.mxu0 0
    %1488 = vmatpush1.bf16.msra.mxu0 %v1464
    %1489 = vmatprep.subr.bf16.mxu0 0
    %1490 = vmatpush1.bf16.msra.mxu0 0
    %1491 = vmatprep.subr.bf16.mxu0 0
    %1492 = vmatpush1.bf16.msra.mxu0 0
    %1493 = vmatprep.subr.bf16.mxu0 0
    %1494 = vmatpush1.bf16.msra.mxu0 0
    %1495 = vmatprep.subr.bf16.mxu0 0
    %1496 = vmatpush1.bf16.msra.mxu0 0
    %1497 = vmatprep.subr.bf16.mxu0 0
    %1498 = vmatpush1.bf16.msra.mxu0 0
    %1499 = vmatprep.subr.bf16.mxu0 0
    %1500 = vmatpush1.bf16.msra.mxu0 0
    %1501 = vmatprep.subr.bf16.mxu0 0
    %1502 = vmatpush1.bf16.msra.mxu0 0
    %1503 = vmatprep.subr.bf16.mxu0 0
    %1504 = vmatpush1.bf16.msra.mxu0 0
    %1505 = vmatprep.mubr.bf16.mxu0 0
    %1506 = vmatmul.mubr.bf16.gmra.mrb[0].mxu0 %v1319
    %v1507 = vpop.f32.mrb[0].mxu0
    %v1508 = vadd.f32 %v1420, %v1507
    %v1509 = vpop.f32.mrb[0].mxu0
    %v1510 = vpop.f32.mrb[0].mxu0
    %v1511 = vpop.f32.mrb[0].mxu0
    %1512 = vdwg.mxu0
    %v1513 = vld [vmem:[%s7 + $0xa] sm:$0x1]
    %v1514 = vadd.f32 %v1508, %v1513
    %v1515 = vxor.u32 %v1514, 2147483648
    %v1516 = vmul.f32 %v1515, 1.442695
    %v1517 = vpow.pop %v1516
    %v1518 = vadd.f32 %v1517, 1.0
    %v1519 = vrcp.pop %v1518
    %v1520 = vmul.f32 1.0, %v1519
    %v1521 = vld [vmem:[#allocation7 + $0x10] sm:$0xf]
    %v1522 = vld [vmem:[#allocation7 + $0x24] sm:$0xf]
    %v1523 = vld [vmem:[#allocation7 + $0x38] sm:$0xf]
    %v1524 = vld [vmem:[#allocation7 + $0x4c] sm:$0xf]
    %v1525 = vld [vmem:[#allocation7 + $0x60] sm:$0xf]
    %v1526 = vld [vmem:[#allocation7 + $0x74] sm:$0xf]
    %v1527 = vld [vmem:[#allocation7 + $0x88] sm:$0xf]
    %v1528 = vld [vmem:[#allocation7 + $0x9c] sm:$0xf]
    %v1529 = vld [vmem:[#allocation7 + $0xb0] sm:$0xf]
    %v1530 = vld [vmem:[#allocation7 + $0xc4] sm:$0xf]
    %v1531 = vld [vmem:[#allocation7 + $0xd8] sm:$0xf]
    %v1532 = vld [vmem:[#allocation7 + $0xec] sm:$0xf]
    %v1533 = vld [vmem:[#allocation7 + $0x100] sm:$0xf]
    %v1534 = vld [vmem:[#allocation7 + $0x114] sm:$0xf]
    %v1535 = vld [vmem:[#allocation7 + $0x128] sm:$0xf]
    %v1536 = vld [vmem:[#allocation7 + $0x13c] sm:$0xf]
    %v1537 = vpack.c.bf16 %v1520, %v1520
    %v1538 = vld [vmem:[%s7 + $0xb] sm:$0x1]
    %v1555 = vunpack.c.l.b16 %v1521
    %v1556 = vunpack.c.l.b16 %v1522
    %v1557 = vunpack.c.l.b16 %v1523
    %v1558 = vunpack.c.l.b16 %v1524
    %v1559 = vunpack.c.l.b16 %v1525
    %v1560 = vunpack.c.l.b16 %v1526
    %v1561 = vunpack.c.l.b16 %v1527
    %v1562 = vunpack.c.l.b16 %v1528
    %v1563 = vunpack.c.l.b16 %v1529
    %v1564 = vunpack.c.l.b16 %v1530
    %v1565 = vunpack.c.l.b16 %v1531
    %v1566 = vunpack.c.l.b16 %v1532
    %v1567 = vunpack.c.l.b16 %v1533
    %v1568 = vunpack.c.l.b16 %v1534
    %v1569 = vunpack.c.l.b16 %v1535
    %v1570 = vunpack.c.l.b16 %v1536
    %v1571 = vpack.c.b16 %v1556, %v1555
    %v1572 = vpack.c.b16 %v1558, %v1557
    %v1573 = vpack.c.b16 %v1560, %v1559
    %v1574 = vpack.c.b16 %v1562, %v1561
    %v1575 = vpack.c.b16 %v1564, %v1563
    %v1576 = vpack.c.b16 %v1566, %v1565
    %v1577 = vpack.c.b16 %v1568, %v1567
    %v1578 = vpack.c.b16 %v1570, %v1569
    %1587 = vmatprep.subr.bf16.mxu0 0
    %1588 = vmatpush1.bf16.msra.mxu0 %v1571
    %1589 = vmatprep.subr.bf16.mxu0 0
    %1590 = vmatpush1.bf16.msra.mxu0 %v1572
    %1591 = vmatprep.subr.bf16.mxu0 0
    %1592 = vmatpush1.bf16.msra.mxu0 %v1573
    %1593 = vmatprep.subr.bf16.mxu0 0
    %1594 = vmatpush1.bf16.msra.mxu0 %v1574
    %1595 = vmatprep.subr.bf16.mxu0 0
    %1596 = vmatpush1.bf16.msra.mxu0 %v1575
    %1597 = vmatprep.subr.bf16.mxu0 0
    %1598 = vmatpush1.bf16.msra.mxu0 %v1576
    %1599 = vmatprep.subr.bf16.mxu0 0
    %1600 = vmatpush1.bf16.msra.mxu0 %v1577
    %1601 = vmatprep.subr.bf16.mxu0 0
    %1602 = vmatpush1.bf16.msra.mxu0 %v1578
    %1603 = vmatprep.subr.bf16.mxu0 0
    %1604 = vmatpush1.bf16.msra.mxu0 0
    %1605 = vmatprep.subr.bf16.mxu0 0
    %1606 = vmatpush1.bf16.msra.mxu0 0
    %1607 = vmatprep.subr.bf16.mxu0 0
    %1608 = vmatpush1.bf16.msra.mxu0 0
    %1609 = vmatprep.subr.bf16.mxu0 0
    %1610 = vmatpush1.bf16.msra.mxu0 0
    %1611 = vmatprep.subr.bf16.mxu0 0
    %1612 = vmatpush1.bf16.msra.mxu0 0
    %1613 = vmatprep.subr.bf16.mxu0 0
    %1614 = vmatpush1.bf16.msra.mxu0 0
    %1615 = vmatprep.subr.bf16.mxu0 0
    %1616 = vmatpush1.bf16.msra.mxu0 0
    %1617 = vmatprep.subr.bf16.mxu0 0
    %1618 = vmatpush1.bf16.msra.mxu0 0
    %1619 = vmatprep.mubr.bf16.mxu0 0
    %1620 = vmatmul.mubr.bf16.gmra.mrb[0].mxu0 %v1537
    %v1621 = vpop.f32.mrb[0].mxu0
    %v1622 = vadd.f32 %v1538, %v1621
    %v1623 = vpop.f32.mrb[0].mxu0
    %v1624 = vpop.f32.mrb[0].mxu0
    %v1625 = vpop.f32.mrb[0].mxu0
    %1626 = vdwg.mxu0
    %1627 = vst [vmem:[#allocation9] sm:$0x1] %v1622
    // Predicated region
    $region42: #{embedding_forward.1} parent=1 // pred_check
      _
    $region43: #{embedding_forward.1} parent=1 // pred_check_branch
      %1629 = sbr.rel (0) target = $region45
    $region44: #{embedding_forward.1} parent=1 // pred_region
      %s1631 = ssub.s32 16, 16
      %1632 = vsyncadd [#allocation6], %s1631
      %s1634 = sshll.u32 [#allocation9], 4
      %s1635 = int_to_ptr.vmem [resolvable:$true] %s1634
      %1637 = dma.vmem_to_hbm [thread:$0]  %s1635, 16, %s9, [#allocation6]
    $region45: #{embedding_forward.1} parent=1 // pred_fallthru
      _
    // Predicated region
    $region46: #{embedding_forward.1} parent=1 // pred_check
      _
    $region47: #{embedding_forward.1} parent=1 // pred_check_branch
      %1639 = sbr.rel (0) target = $region49
    $region48: #{embedding_forward.1} parent=1 // pred_region
      %1640 = dma.done [#allocation6], 16
    $region49: #{embedding_forward.1} parent=1 // pred_fallthru
      _
    %1641 = vsyncpa [#allocation5], 1
    %1642 = vsyncpa [#allocation8], 1
    %1643 = vsyncpa [#allocation6], 1
  %1644 = vsyncmov [#allocation3]
  %s1645 = vpop.sfrf %1644
  %p1646 = scmp.eq.s32.totalorder %s1645, 0
  %p1647 = pneg %p1646
  %1649 = shalt.err (%p1647)

</llo_original>
